<compile_context>
chip_gen: v6e
topology: v6e:2x2x1
jax: 0.10.0
libtpu: 0.0.40
codegen_flags: <defaults>
</compile_context>

<pallas_src>
import functools

import jax
import jax.numpy as jnp
from jax.experimental import pallas as pl
from jax.experimental.pallas import tpu as pltpu


def _multipole_kernel(feat_ref, fv_ref, w0_ref, b0_ref, w1_ref, b1_ref, wm1_ref,
                      out_ref, *, compute_dtype):
    """Fused MLP + Dense(M1) + scaling for one tile of atoms.

    feat_ref : (TN, F)   f32  -- cast to compute_dtype in-kernel right before the MXU
    fv_ref   : (TN, 3F)  f32  -- feat_v flattened, [n, f*3+d] = feat_v[n, f, d]
    w0_ref   : (F, H)    cdt      b0_ref : (1, H) f32
    w1_ref   : (H, 2)    cdt      b1_ref : (1, 2) f32
    wm1_ref  : (3F, 3)   cdt  -- expanded Dense(M1) weight
    out_ref  : (TN, 4)   f32  -- [:, 0] = M0, [:, 1:4] = M1
    """
    cdt = compute_dtype
    feat = feat_ref[...].astype(cdt)   # cheap per-tile VPU cast, hidden under DMA
    fv = fv_ref[...].astype(cdt)

    # --- MLP head: s = Linear2(SiLU(Linear1(feat))) --------------------------------
    h = jnp.dot(feat, w0_ref[...],
                preferred_element_type=jnp.float32) + b0_ref[...]          # (TN, H) f32
    h = jax.nn.silu(h)                                                     # f32 (v5e-safe)
    s = jnp.dot(h.astype(cdt), w1_ref[...],
                preferred_element_type=jnp.float32) + b1_ref[...]          # (TN, 2) f32

    # --- M1 raw = Dense_nobias over feature axis, as one MXU matmul ----------------
    m1raw = jnp.dot(fv, wm1_ref[...],
                    preferred_element_type=jnp.float32)                    # (TN, 3) f32

    # --- single packed store: [M0 | s1 * M1raw] -------------------------------------
    out_ref[...] = jnp.concatenate([s[:, 0:1], s[:, 1:2] * m1raw], axis=1)


def _round_up(x, m):
    return ((x + m - 1) // m) * m


def multipole_forward(feat, feat_v, params, *, tile_n=2048, use_bf16=True):
    """feat: (N, F) f32, feat_v: (N, F, 3) f32. Returns dict with 'M0' (N,), 'M1' (N,1,3)."""
    N, F = feat.shape
    H = params["W0"].shape[1]
    cdt = jnp.bfloat16 if use_bf16 else jnp.float32

    # Free contiguous reshape (no transpose, no dtype pass, no HBM round-trip).
    fv_flat = feat_v.reshape(N, F * 3)

    # Tiny resident weights: cast MXU operands once; biases stay f32.
    W0 = params["W0"].astype(cdt)
    b0 = params["b0"].astype(jnp.float32)
    W1 = params["W1"].astype(cdt)
    b1 = params["b1"].astype(jnp.float32)
    # Expanded M1 weight: Wm1_exp[f*3 + d, d'] = Wm1[f] * (d == d')
    Wm1_exp = (params["Wm1"][0][:, None, None] *
               jnp.eye(3, dtype=jnp.float32)[None]).reshape(F * 3, 3).astype(cdt)

    # Big tiles amortize per-step overhead (kernel is HBM-bound); cap so grid_n >= 2
    # so the "parallel" axis can shard across both TensorCores on v7x.  Ragged last
    # tile handled by Pallas partial-block masking (rows are independent).
    tile = max(8, min(tile_n, _round_up(-(-N // 2), 8)))
    grid_n = pl.cdiv(N, tile)

    kernel = functools.partial(_multipole_kernel, compute_dtype=cdt)
    packed = pl.pallas_call(
        kernel,
        out_shape=jax.ShapeDtypeStruct((N, 4), jnp.float32),
        grid_spec=pltpu.PrefetchScalarGridSpec(
            num_scalar_prefetch=0,
            grid=(grid_n,),
            in_specs=[
                pl.BlockSpec((tile, F), lambda i: (i, 0)),        # feat tile (f32)
                pl.BlockSpec((tile, 3 * F), lambda i: (i, 0)),    # feat_v flat tile (f32)
                pl.BlockSpec((F, H), lambda i: (0, 0)),           # W0   (resident)
                pl.BlockSpec((1, H), lambda i: (0, 0)),           # b0
                pl.BlockSpec((H, 2), lambda i: (0, 0)),           # W1
                pl.BlockSpec((1, 2), lambda i: (0, 0)),           # b1
                pl.BlockSpec((3 * F, 3), lambda i: (0, 0)),       # Wm1_exp
            ],
            out_specs=pl.BlockSpec((tile, 4), lambda i: (i, 0)),  # packed [M0|M1]
        ),
        compiler_params=pltpu.CompilerParams(dimension_semantics=("parallel",)),
    )(feat, fv_flat, W0, b0, W1, b1, Wm1_exp)

    return {"M0": packed[:, 0], "M1": packed[:, None, 1:4]}


def multipole_reference(feat, feat_v, params):
    """Pure-JAX reference mirroring the PyTorch forward (max_order=1), f32."""
    W0, b0, W1, b1, Wm1 = (params["W0"], params["b0"], params["W1"],
                           params["b1"], params["Wm1"])
    h = jax.nn.silu(feat @ W0 + b0)
    s = h @ W1 + b1                                        # (N, 2)
    # Dense(n_atom_basis, 1, bias=False) applied to feat_v.permute(0,2,1), permuted back.
    m1raw = jnp.einsum("nfd,f->nd", feat_v, Wm1[0])        # (N, 3)
    return {"M0": s[:, 0], "M1": (s[:, 1:2] * m1raw)[:, None, :]}


def init_params(key, n_atom_basis, n_hidden, outdim=2):
    k0, k1, k2 = jax.random.split(key, 3)
    return {
        # MLP 's': Linear(n_atom_basis, n_hidden) -> SiLU -> Linear(n_hidden, outdim)
        "W0": 0.1 * jax.random.normal(k0, (n_atom_basis, n_hidden), jnp.float32),
        "b0": jnp.zeros((1, n_hidden), jnp.float32),
        "W1": 0.1 * jax.random.normal(k1, (n_hidden, outdim), jnp.float32),
        "b1": jnp.zeros((1, outdim), jnp.float32),
        # Dense 'M1': Linear(n_atom_basis, 1, bias=False)
        "Wm1": 0.1 * jax.random.normal(k2, (1, n_atom_basis), jnp.float32),
    }


if __name__ == "__main__":
    N = 500             # number of atoms (deliberately not a multiple of the tile)
    n_atom_basis = 32   # feature width F
    n_hidden = 32       # MLP hidden width H

    key = jax.random.PRNGKey(0)
    kf, kv, kp = jax.random.split(key, 3)
    feat = jax.random.normal(kf, (N, n_atom_basis), jnp.float32)
    feat_v = jax.random.normal(kv, (N, n_atom_basis, 3), jnp.float32)
    params = init_params(kp, n_atom_basis, n_hidden)

    ref = multipole_reference(feat, feat_v, params)

    # Exact-semantics check (f32 path).
    run_f32 = jax.jit(functools.partial(multipole_forward, use_bf16=False))
    out32 = run_f32(feat, feat_v, params)
    jax.block_until_ready(out32)
    assert out32["M0"].shape == (N,)
    assert out32["M1"].shape == (N, 1, 3)
    assert jnp.allclose(out32["M0"], ref["M0"], atol=1e-4, rtol=1e-4)
    assert jnp.allclose(out32["M1"], ref["M1"], atol=1e-4, rtol=1e-4)

    # Default fast path: bf16 MXU operands (cast in-kernel), f32 accumulation / SiLU.
    run_bf16 = jax.jit(functools.partial(multipole_forward, use_bf16=True))
    out16 = run_bf16(feat, feat_v, params)
    jax.block_until_ready(out16)
    assert out16["M0"].shape == (N,)
    assert out16["M1"].shape == (N, 1, 3)
    assert jnp.allclose(out16["M0"], ref["M0"], atol=5e-2, rtol=5e-2)
    assert jnp.allclose(out16["M1"], ref["M1"], atol=5e-2, rtol=5e-2)

    print("KERNEL_OK")
</pallas_src>

<mosaic_0001>
module attributes {stable_mosaic.version = 11 : i64} {
  func.func @_multipole_kernel(%arg0: i32, %arg1: memref<256x32xf32, #tpu.memory_space<vmem>>, %arg2: memref<256x96xf32, #tpu.memory_space<vmem>>, %arg3: memref<32x32xf32, #tpu.memory_space<vmem>>, %arg4: memref<1x32xf32, #tpu.memory_space<vmem>>, %arg5: memref<32x2xf32, #tpu.memory_space<vmem>>, %arg6: memref<1x2xf32, #tpu.memory_space<vmem>>, %arg7: memref<96x3xf32, #tpu.memory_space<vmem>>, %arg8: memref<256x4xf32, #tpu.memory_space<vmem>>) attributes {dimension_semantics = [#tpu.dimension_semantics<parallel>], iteration_bounds = array<i64: 2>, scalar_prefetch = 0 : i64, scratch_operands = 0 : i64, tpu.core_type = #tpu.core_type<tc>, window_params = [{transform_indices = @transform_0, window_bounds = array<i64: 256, 32>}, {transform_indices = @transform_1, window_bounds = array<i64: 256, 96>}, {pipeline_mode = #tpu.pipeline_mode<synchronous>, transform_indices = @transform_2, window_bounds = array<i64: 32, 32>}, {pipeline_mode = #tpu.pipeline_mode<synchronous>, transform_indices = @transform_3, window_bounds = array<i64: 1, 32>}, {pipeline_mode = #tpu.pipeline_mode<synchronous>, transform_indices = @transform_4, window_bounds = array<i64: 32, 2>}, {pipeline_mode = #tpu.pipeline_mode<synchronous>, transform_indices = @transform_5, window_bounds = array<i64: 1, 2>}, {pipeline_mode = #tpu.pipeline_mode<synchronous>, transform_indices = @transform_6, window_bounds = array<i64: 96, 3>}, {transform_indices = @transform_7, window_bounds = array<i64: 256, 4>}]} {
    %c0 = arith.constant 0 : index
    %c0_0 = arith.constant 0 : index
    %0 = vector.load %arg1[%c0, %c0_0] : memref<256x32xf32, #tpu.memory_space<vmem>>, vector<256x32xf32>
    %c0_1 = arith.constant 0 : index
    %c0_2 = arith.constant 0 : index
    %1 = vector.load %arg2[%c0_1, %c0_2] : memref<256x96xf32, #tpu.memory_space<vmem>>, vector<256x96xf32>
    %c0_3 = arith.constant 0 : index
    %c0_4 = arith.constant 0 : index
    %2 = vector.load %arg3[%c0_3, %c0_4] : memref<32x32xf32, #tpu.memory_space<vmem>>, vector<32x32xf32>
    %cst = arith.constant dense<0.000000e+00> : vector<256x32xf32>
    %3 = tpu.matmul %0, %2, %cst {dimension_numbers = #tpu.dot_dimension_numbers<[1], [0], [0], [1], [0, 0, 1, 1], [], []>} : vector<256x32xf32>, vector<32x32xf32>, vector<256x32xf32> -> vector<256x32xf32>
    %c0_5 = arith.constant 0 : index
    %c0_6 = arith.constant 0 : index
    %4 = vector.load %arg4[%c0_5, %c0_6] : memref<1x32xf32, #tpu.memory_space<vmem>>, vector<1x32xf32>
    %5 = vector.broadcast %4 : vector<1x32xf32> to vector<256x32xf32>
    %6 = arith.addf %3, %5 : vector<256x32xf32>
    %7 = arith.negf %6 : vector<256x32xf32>
    %8 = math.exp %7 : vector<256x32xf32>
    %cst_7 = arith.constant 1.000000e+00 : f32
    %9 = vector.broadcast %cst_7 : f32 to vector<256x32xf32>
    %10 = arith.addf %9, %8 : vector<256x32xf32>
    %11 = arith.divf %9, %10 : vector<256x32xf32>
    %12 = arith.mulf %6, %11 : vector<256x32xf32>
    %c0_8 = arith.constant 0 : index
    %c0_9 = arith.constant 0 : index
    %13 = vector.load %arg5[%c0_8, %c0_9] : memref<32x2xf32, #tpu.memory_space<vmem>>, vector<32x2xf32>
    %cst_10 = arith.constant dense<0.000000e+00> : vector<256x2xf32>
    %14 = tpu.matmul %12, %13, %cst_10 {dimension_numbers = #tpu.dot_dimension_numbers<[1], [0], [0], [1], [0, 0, 1, 1], [], []>} : vector<256x32xf32>, vector<32x2xf32>, vector<256x2xf32> -> vector<256x2xf32>
    %c0_11 = arith.constant 0 : index
    %c0_12 = arith.constant 0 : index
    %15 = vector.load %arg6[%c0_11, %c0_12] : memref<1x2xf32, #tpu.memory_space<vmem>>, vector<1x2xf32>
    %16 = vector.broadcast %15 : vector<1x2xf32> to vector<256x2xf32>
    %17 = arith.addf %14, %16 : vector<256x2xf32>
    %c0_13 = arith.constant 0 : index
    %c0_14 = arith.constant 0 : index
    %18 = vector.load %arg7[%c0_13, %c0_14] : memref<96x3xf32, #tpu.memory_space<vmem>>, vector<96x3xf32>
    %cst_15 = arith.constant dense<0.000000e+00> : vector<256x3xf32>
    %19 = tpu.matmul %1, %18, %cst_15 {dimension_numbers = #tpu.dot_dimension_numbers<[1], [0], [0], [1], [0, 0, 1, 1], [], []>} : vector<256x96xf32>, vector<96x3xf32>, vector<256x3xf32> -> vector<256x3xf32>
    %20 = vector.extract_strided_slice %17 {offsets = [0, 0], sizes = [256, 1], strides = [1, 1]} : vector<256x2xf32> to vector<256x1xf32>
    %21 = vector.extract_strided_slice %17 {offsets = [0, 1], sizes = [256, 1], strides = [1, 1]} : vector<256x2xf32> to vector<256x1xf32>
    %22 = vector.broadcast %21 : vector<256x1xf32> to vector<256x3xf32>
    %23 = arith.mulf %22, %19 : vector<256x3xf32>
    %24 = tpu.concatenate %20, %23 in 1 : vector<256x1xf32>, vector<256x3xf32> -> vector<256x4xf32>
    %c0_16 = arith.constant 0 : index
    %c0_17 = arith.constant 0 : index
    %25 = vector.load %arg8[%c0_16, %c0_17] : memref<256x4xf32, #tpu.memory_space<vmem>>, vector<256x4xf32>
    tpu.vector_store %arg8[%c0_16, %c0_17], %24 {strides = array<i32>} : memref<256x4xf32, #tpu.memory_space<vmem>>, vector<256x4xf32>,
    return
  }
  func.func @transform_0(%arg0: i32) -> (i32, i32) {
    %c0_i32 = arith.constant 0 : i32
    %c0_i32_0 = arith.constant 0 : i32
    return %arg0, %c0_i32 : i32, i32
  }
  func.func @transform_1(%arg0: i32) -> (i32, i32) {
    %c0_i32 = arith.constant 0 : i32
    %c0_i32_0 = arith.constant 0 : i32
    return %arg0, %c0_i32 : i32, i32
  }
  func.func @transform_2(%arg0: i32) -> (i32, i32) {
    %c0_i32 = arith.constant 0 : i32
    %c0_i32_0 = arith.constant 0 : i32
    %c0_i32_1 = arith.constant 0 : i32
    return %c0_i32, %c0_i32_0 : i32, i32
  }
  func.func @transform_3(%arg0: i32) -> (i32, i32) {
    %c0_i32 = arith.constant 0 : i32
    %c0_i32_0 = arith.constant 0 : i32
    %c0_i32_1 = arith.constant 0 : i32
    return %c0_i32, %c0_i32_0 : i32, i32
  }
  func.func @transform_4(%arg0: i32) -> (i32, i32) {
    %c0_i32 = arith.constant 0 : i32
    %c0_i32_0 = arith.constant 0 : i32
    %c0_i32_1 = arith.constant 0 : i32
    return %c0_i32, %c0_i32_0 : i32, i32
  }
  func.func @transform_5(%arg0: i32) -> (i32, i32) {
    %c0_i32 = arith.constant 0 : i32
    %c0_i32_0 = arith.constant 0 : i32
    %c0_i32_1 = arith.constant 0 : i32
    return %c0_i32, %c0_i32_0 : i32, i32
  }
  func.func @transform_6(%arg0: i32) -> (i32, i32) {
    %c0_i32 = arith.constant 0 : i32
    %c0_i32_0 = arith.constant 0 : i32
    %c0_i32_1 = arith.constant 0 : i32
    return %c0_i32, %c0_i32_0 : i32, i32
  }
  func.func @transform_7(%arg0: i32) -> (i32, i32) {
    %c0_i32 = arith.constant 0 : i32
    %c0_i32_0 = arith.constant 0 : i32
    return %arg0, %c0_i32 : i32, i32
  }
}

</mosaic_0001>

<llo_original>
// kernel: multipole_forward.1
$region0: #{multipole_forward.1}
  #allocation0 [shape = 'u32[]', space=smem, size = 0x4, offset = 0x4, fixed_abs, tag = 'smem constant byte address 0x4 - core index']
  #allocation1 [shape = 'u32[144,128]{1,0:T(1,128)}', space=vmem, size = 0x12000, scoped, tag = 'internal scratch']
  %s0 = inlined_call_operand.vmem [shape: f32[500,32], index: 0, kind: input, shape index: {}]
  %s1 = inlined_call_operand.vmem [shape: f32[500,96], index: 1, kind: input, shape index: {}]
  %s2 = inlined_call_operand.vmem [shape: f32[32,32], index: 2, kind: input, shape index: {}]
  %s3 = inlined_call_operand.vmem [shape: f32[1,32], index: 3, kind: input, shape index: {}]
  %s4 = inlined_call_operand.vmem [shape: f32[32,2], index: 4, kind: input, shape index: {}]
  %s5 = inlined_call_operand.vmem [shape: f32[1,2], index: 5, kind: input, shape index: {}]
  %s6 = inlined_call_operand.vmem [shape: f32[96,3], index: 6, kind: input, shape index: {}]
  %s7 = inlined_call_operand.vmem [shape: f32[500,4], index: 7, kind: output, shape index: {}]
  %s8 = sld [smem:[#allocation0]]
  $region109: #{multipole_forward.1} parent=0
    _
  %s10 = ssub.s32 1, %s8
  %s11 = scalar_select 0, %s10, %s8
  $region1: #{multipole_forward.1} parent=0
    #allocation2 [shape = 'u8[262144]{0}', space=vmem, size = 0x40000, scoped, tag = 'output window, operand 0']
    loop: start=0, step=1, limit=4
    $region2: #{multipole_forward.1} parent=1 // loop_pre_header
      _
    $region3: #{multipole_forward.1} parent=1 // loop_header
      %s13 = sphi 0, %s17
      %p14 = scmp.ge.s32.totalorder %s13, 4
      %s23 = sphi 0, %s25
      %s26 = sphi 0, %s23
      %s27 = sphi 0, %s26
      %s43 = sphi 0, %s27
      %s49 = sphi 0, %s51
      %s52 = sphi 0, %s49
      %s53 = sphi 0, %s52
      %s69 = sphi 0, %s53
      %s73 = sphi 0, %s73
      %s75 = sphi 0, %s73
      %s76 = sphi 0, %s75
      %s90 = sphi 0, %s76
      %s94 = sphi 0, %s94
      %s96 = sphi 0, %s94
      %s97 = sphi 0, %s96
      %s111 = sphi 0, %s97
      %s115 = sphi 0, %s115
      %s117 = sphi 0, %s115
      %s118 = sphi 0, %s117
      %s132 = sphi 0, %s118
      %s136 = sphi 0, %s136
      %s138 = sphi 0, %s136
      %s139 = sphi 0, %s138
      %s153 = sphi 0, %s139
      %s157 = sphi 0, %s157
      %s159 = sphi 0, %s157
      %s160 = sphi 0, %s159
      %s174 = sphi 0, %s160
      %s180 = sphi 0, %s182
      %s183 = sphi 0, %s180
      %s184 = sphi 0, %s183
      %s200 = sphi 0, %s184
    $region4: #{multipole_forward.1} parent=1 // loop_header_branch
      %16 = sbr.rel (%p14) target = $region8
    $region5: #{multipole_forward.1} parent=1 // loop_body
      %s18 = ssub.s32 %s13, 1
      %s19 = ssub.s32 %s13, 2
      %s20 = sadd.s32 %s13, 1
      %s21 = ssub.s32 %s13, %s20
      %p22 = scmp.eq.s32.totalorder %s21, 0
      %s24 = sadd.s32 %s23, 1
      %s25 = scalar_select %p22, %s23, %s24
      %p28 = pneg %p22
      %p29 = scmp.eq.s32.totalorder %s13, 1
      %p30 = por %p28, %p29
      %p31 = scmp.ne.s32.totalorder %s23, %s26
      %p32 = scmp.eq.s32.totalorder %s13, 0
      %p33 = por %p31, %p32
      %p34 = scmp.ne.s32.totalorder %s23, %s26
      %p35 = scmp.eq.s32.totalorder %s18, 1
      %p36 = por %p34, %p35
      %p37 = scmp.ne.s32.totalorder %s26, %s27
      %p38 = scmp.eq.s32.totalorder %s18, 0
      %p39 = por %p37, %p38
      %p40 = scmp.ne.s32.totalorder %s26, %s27
      %p41 = scmp.eq.s32.totalorder %s19, 1
      %p42 = por %p40, %p41
      %p44 = scmp.ne.s32.totalorder %s27, %s43
      %p45 = scmp.eq.s32.totalorder %s19, 0
      %p46 = por %p44, %p45
      %s47 = ssub.s32 %s13, %s20
      %p48 = scmp.eq.s32.totalorder %s47, 0
      %s50 = sadd.s32 %s49, 1
      %s51 = scalar_select %p48, %s49, %s50
      %p54 = pneg %p48
      %p55 = scmp.eq.s32.totalorder %s13, 1
      %p56 = por %p54, %p55
      %p57 = scmp.ne.s32.totalorder %s49, %s52
      %p58 = scmp.eq.s32.totalorder %s13, 0
      %p59 = por %p57, %p58
      %p60 = scmp.ne.s32.totalorder %s49, %s52
      %p61 = scmp.eq.s32.totalorder %s18, 1
      %p62 = por %p60, %p61
      %p63 = scmp.ne.s32.totalorder %s52, %s53
      %p64 = scmp.eq.s32.totalorder %s18, 0
      %p65 = por %p63, %p64
      %p66 = scmp.ne.s32.totalorder %s52, %s53
      %p67 = scmp.eq.s32.totalorder %s19, 1
      %p68 = por %p66, %p67
      %p70 = scmp.ne.s32.totalorder %s53, %s69
      %p71 = scmp.eq.s32.totalorder %s19, 0
      %p72 = por %p70, %p71
      %s74 = sadd.s32 %s73, 1
      %p77 = scmp.eq.s32.totalorder %s13, 1
      %p78 = scmp.ne.s32.totalorder %s73, %s75
      %p79 = scmp.eq.s32.totalorder %s13, 0
      %p80 = por %p78, %p79
      %p81 = scmp.ne.s32.totalorder %s73, %s75
      %p82 = scmp.eq.s32.totalorder %s18, 1
      %p83 = por %p81, %p82
      %p84 = scmp.ne.s32.totalorder %s75, %s76
      %p85 = scmp.eq.s32.totalorder %s18, 0
      %p86 = por %p84, %p85
      %p87 = scmp.ne.s32.totalorder %s75, %s76
      %p88 = scmp.eq.s32.totalorder %s19, 1
      %p89 = por %p87, %p88
      %p91 = scmp.ne.s32.totalorder %s76, %s90
      %p92 = scmp.eq.s32.totalorder %s19, 0
      %p93 = por %p91, %p92
      %s95 = sadd.s32 %s94, 1
      %p98 = scmp.eq.s32.totalorder %s13, 1
      %p99 = scmp.ne.s32.totalorder %s94, %s96
      %p100 = scmp.eq.s32.totalorder %s13, 0
      %p101 = por %p99, %p100
      %p102 = scmp.ne.s32.totalorder %s94, %s96
      %p103 = scmp.eq.s32.totalorder %s18, 1
      %p104 = por %p102, %p103
      %p105 = scmp.ne.s32.totalorder %s96, %s97
      %p106 = scmp.eq.s32.totalorder %s18, 0
      %p107 = por %p105, %p106
      %p108 = scmp.ne.s32.totalorder %s96, %s97
      %p109 = scmp.eq.s32.totalorder %s19, 1
      %p110 = por %p108, %p109
      %p112 = scmp.ne.s32.totalorder %s97, %s111
      %p113 = scmp.eq.s32.totalorder %s19, 0
      %p114 = por %p112, %p113
      %s116 = sadd.s32 %s115, 1
      %p119 = scmp.eq.s32.totalorder %s13, 1
      %p120 = scmp.ne.s32.totalorder %s115, %s117
      %p121 = scmp.eq.s32.totalorder %s13, 0
      %p122 = por %p120, %p121
      %p123 = scmp.ne.s32.totalorder %s115, %s117
      %p124 = scmp.eq.s32.totalorder %s18, 1
      %p125 = por %p123, %p124
      %p126 = scmp.ne.s32.totalorder %s117, %s118
      %p127 = scmp.eq.s32.totalorder %s18, 0
      %p128 = por %p126, %p127
      %p129 = scmp.ne.s32.totalorder %s117, %s118
      %p130 = scmp.eq.s32.totalorder %s19, 1
      %p131 = por %p129, %p130
      %p133 = scmp.ne.s32.totalorder %s118, %s132
      %p134 = scmp.eq.s32.totalorder %s19, 0
      %p135 = por %p133, %p134
      %s137 = sadd.s32 %s136, 1
      %p140 = scmp.eq.s32.totalorder %s13, 1
      %p141 = scmp.ne.s32.totalorder %s136, %s138
      %p142 = scmp.eq.s32.totalorder %s13, 0
      %p143 = por %p141, %p142
      %p144 = scmp.ne.s32.totalorder %s136, %s138
      %p145 = scmp.eq.s32.totalorder %s18, 1
      %p146 = por %p144, %p145
      %p147 = scmp.ne.s32.totalorder %s138, %s139
      %p148 = scmp.eq.s32.totalorder %s18, 0
      %p149 = por %p147, %p148
      %p150 = scmp.ne.s32.totalorder %s138, %s139
      %p151 = scmp.eq.s32.totalorder %s19, 1
      %p152 = por %p150, %p151
      %p154 = scmp.ne.s32.totalorder %s139, %s153
      %p155 = scmp.eq.s32.totalorder %s19, 0
      %p156 = por %p154, %p155
      %s158 = sadd.s32 %s157, 1
      %p161 = scmp.eq.s32.totalorder %s13, 1
      %p162 = scmp.ne.s32.totalorder %s157, %s159
      %p163 = scmp.eq.s32.totalorder %s13, 0
      %p164 = por %p162, %p163
      %p165 = scmp.ne.s32.totalorder %s157, %s159
      %p166 = scmp.eq.s32.totalorder %s18, 1
      %p167 = por %p165, %p166
      %p168 = scmp.ne.s32.totalorder %s159, %s160
      %p169 = scmp.eq.s32.totalorder %s18, 0
      %p170 = por %p168, %p169
      %p171 = scmp.ne.s32.totalorder %s159, %s160
      %p172 = scmp.eq.s32.totalorder %s19, 1
      %p173 = por %p171, %p172
      %p175 = scmp.ne.s32.totalorder %s160, %s174
      %p176 = scmp.eq.s32.totalorder %s19, 0
      %p177 = por %p175, %p176
      %s178 = ssub.s32 %s13, %s20
      %p179 = scmp.eq.s32.totalorder %s178, 0
      %s181 = sadd.s32 %s180, 1
      %s182 = scalar_select %p179, %s180, %s181
      %p185 = pneg %p179
      %p186 = scmp.eq.s32.totalorder %s13, 1
      %p187 = por %p185, %p186
      %p188 = scmp.ne.s32.totalorder %s180, %s183
      %p189 = scmp.eq.s32.totalorder %s13, 0
      %p190 = por %p188, %p189
      %p191 = scmp.ne.s32.totalorder %s180, %s183
      %p192 = scmp.eq.s32.totalorder %s18, 1
      %p193 = por %p191, %p192
      %p194 = scmp.ne.s32.totalorder %s183, %s184
      %p195 = scmp.eq.s32.totalorder %s18, 0
      %p196 = por %p194, %p195
      %p197 = scmp.ne.s32.totalorder %s183, %s184
      %p198 = scmp.eq.s32.totalorder %s19, 1
      %p199 = por %p197, %p198
      %p201 = scmp.ne.s32.totalorder %s184, %s200
      %p202 = scmp.eq.s32.totalorder %s19, 0
      %p203 = por %p201, %p202
      %p204 = scmp.le.s32.totalorder 1, %s13
      %p205 = scmp.lt.s32.totalorder %s13, 3
      %p206 = pnand %p204, %p205
      %p207 = pneg %p206
      // Predicated region
      $region9: #{multipole_forward.1} parent=5 // pred_check
        _
      $region10: #{multipole_forward.1} parent=5 // pred_check_branch
        %209 = sbr.rel (%p206) target = $region12
      $region11: #{multipole_forward.1} parent=5 // pred_region
        %s210 = ssub.s32 %s13, 1
        // Predicated region
        $region13: #{multipole_forward.1} parent=11 // pred_check
          %p211 = pneg %p86
        $region14: #{multipole_forward.1} parent=11 // pred_check_branch
          %213 = sbr.rel (%p211) target = $region16
        $region15: #{multipole_forward.1} parent=11 // pred_region
          _
        $region16: #{multipole_forward.1} parent=11 // pred_fallthru
          _
        // Predicated region
        $region17: #{multipole_forward.1} parent=11 // pred_check
          %p214 = pneg %p107
        $region18: #{multipole_forward.1} parent=11 // pred_check_branch
          %216 = sbr.rel (%p214) target = $region20
        $region19: #{multipole_forward.1} parent=11 // pred_region
          _
        $region20: #{multipole_forward.1} parent=11 // pred_fallthru
          _
        // Predicated region
        $region21: #{multipole_forward.1} parent=11 // pred_check
          %p217 = pneg %p128
        $region22: #{multipole_forward.1} parent=11 // pred_check_branch
          %219 = sbr.rel (%p217) target = $region24
        $region23: #{multipole_forward.1} parent=11 // pred_region
          _
        $region24: #{multipole_forward.1} parent=11 // pred_fallthru
          _
        // Predicated region
        $region25: #{multipole_forward.1} parent=11 // pred_check
          %p220 = pneg %p149
        $region26: #{multipole_forward.1} parent=11 // pred_check_branch
          %222 = sbr.rel (%p220) target = $region28
        $region27: #{multipole_forward.1} parent=11 // pred_region
          _
        $region28: #{multipole_forward.1} parent=11 // pred_fallthru
          _
        // Predicated region
        $region29: #{multipole_forward.1} parent=11 // pred_check
          %p223 = pneg %p170
        $region30: #{multipole_forward.1} parent=11 // pred_check_branch
          %225 = sbr.rel (%p223) target = $region32
        $region31: #{multipole_forward.1} parent=11 // pred_region
          _
        $region32: #{multipole_forward.1} parent=11 // pred_fallthru
          _
      $region12: #{multipole_forward.1} parent=5 // pred_fallthru
        _
      %p226 = scmp.lt.s32.totalorder %s13, 2
      // Predicated region
      $region33: #{multipole_forward.1} parent=5 // pred_check
        %p227 = pneg %p226
      $region34: #{multipole_forward.1} parent=5 // pred_check_branch
        %229 = sbr.rel (%p227) target = $region36
      $region35: #{multipole_forward.1} parent=5 // pred_region
        // Predicated region
        $region37: #{multipole_forward.1} parent=35 // pred_check
          %p230 = pneg %p33
        $region38: #{multipole_forward.1} parent=35 // pred_check_branch
          %232 = sbr.rel (%p230) target = $region40
        $region39: #{multipole_forward.1} parent=35 // pred_region
          %s233 = smul.u32 32, %s13
          %s234 = ssub.s32 63, %s233
          %p235 = scmp.lt.s32.totalorder %s234, 32
          %s236 = scalar_select %p235, %s234, 32
          %s237 = smul.u32 128, %s236
          %p238 = scmp.lt.s32.totalorder %s233, 62
          %s239 = scalar_select %p238, %s233, 62
          %s240 = smul.addr %s239, 8
          %s241 = scalar_lea.vmem %s0, %s240
          %s242 = smul.u32 32, %s13
          %s243 = ssub.s32 63, %s242
          %p244 = scmp.lt.s32.totalorder %s243, 32
          %s245 = scalar_select %p244, %s243, 32
          %s246 = smul.u32 128, %s245
        $region40: #{multipole_forward.1} parent=35 // pred_fallthru
          _
        // Predicated region
        $region41: #{multipole_forward.1} parent=35 // pred_check
          %p247 = pneg %p59
        $region42: #{multipole_forward.1} parent=35 // pred_check_branch
          %249 = sbr.rel (%p247) target = $region44
        $region43: #{multipole_forward.1} parent=35 // pred_region
          %s250 = smul.u32 32, %s13
          %s251 = ssub.s32 63, %s250
          %p252 = scmp.lt.s32.totalorder %s251, 32
          %s253 = scalar_select %p252, %s251, 32
          %s254 = smul.u32 128, %s253
          %p255 = scmp.lt.s32.totalorder %s250, 62
          %s256 = scalar_select %p255, %s250, 62
          %s257 = smul.addr %s256, 8
          %s258 = scalar_lea.vmem %s1, %s257
          %s259 = smul.u32 32, %s13
          %s260 = ssub.s32 63, %s259
          %p261 = scmp.lt.s32.totalorder %s260, 32
          %s262 = scalar_select %p261, %s260, 32
          %s263 = smul.u32 128, %s262
        $region44: #{multipole_forward.1} parent=35 // pred_fallthru
          _
      $region36: #{multipole_forward.1} parent=5 // pred_fallthru
        _
      %p264 = scmp.le.s32.totalorder 1, %s13
      %p265 = scmp.lt.s32.totalorder %s13, 3
      %p266 = pnand %p264, %p265
      %p267 = pneg %p266
      // Predicated region
      $region45: #{multipole_forward.1} parent=5 // pred_check
        _
      $region46: #{multipole_forward.1} parent=5 // pred_check_branch
        %269 = sbr.rel (%p266) target = $region48
      $region47: #{multipole_forward.1} parent=5 // pred_region
        %s270 = ssub.s32 %s13, 1
        %s271 = smul.u32 32, %s18
        %s272 = ssub.s32 63, %s271
        %p273 = scmp.lt.s32.totalorder %s272, 32
        %s274 = scalar_select %p273, %s272, 32
        %s275 = smul.u32 128, %s274
        %p276 = scmp.lt.s32.totalorder %s271, 62
        %s277 = scalar_select %p276, %s271, 62
        %s278 = smul.addr %s277, 8
        %s279 = scalar_lea.vmem %s0, %s278
        %p280 = pneg %p39
        %p281 = pneg %p36
        %s282 = smul.u32 32, %s18
        %s283 = ssub.s32 63, %s282
        %p284 = scmp.lt.s32.totalorder %s283, 32
        %s285 = scalar_select %p284, %s283, 32
        %s286 = smul.u32 128, %s285
        %p287 = scmp.lt.s32.totalorder %s282, 62
        %s288 = scalar_select %p287, %s282, 62
        %s289 = smul.addr %s288, 8
        %s290 = scalar_lea.vmem %s1, %s289
        %p291 = pneg %p65
        %p292 = pneg %p62
        %p293 = pneg %p86
        %p294 = pneg %p83
        %p295 = pneg %p107
        %p296 = pneg %p104
        %p297 = pneg %p128
        %p298 = pneg %p125
        %p299 = pneg %p149
        %p300 = pneg %p146
        %p301 = pneg %p170
        %p302 = pneg %p167
        %p303 = pneg %p196
        %p304 = pneg %p193
        %s305 = sand.u32 %s183, 1
        %s306 = sand.u32 %s183, 1
        %s307 = smul.addr %s306, 256
        %s308 = scalar_lea.vmem [#allocation2], %s307
        %s309 = smul.u32 32, %s18
        %s310 = ssub.s32 63, %s309
        %p311 = scmp.lt.s32.totalorder %s310, 32
        %s312 = scalar_select %p311, %s310, 32
        %s313 = smul.u32 128, %s312
        %p314 = scmp.lt.s32.totalorder %s309, 62
        %s315 = scalar_select %p314, %s309, 62
        %s316 = smul.addr %s315, 8
        %s317 = scalar_lea.vmem %s0, %s316
        %s318 = smul.u32 32, %s18
        %s319 = ssub.s32 63, %s318
        %p320 = scmp.lt.s32.totalorder %s319, 32
        %s321 = scalar_select %p320, %s319, 32
        %s322 = smul.u32 128, %s321
        %s323 = smul.u32 32, %s18
        %s324 = ssub.s32 63, %s323
        %p325 = scmp.lt.s32.totalorder %s324, 32
        %s326 = scalar_select %p325, %s324, 32
        %s327 = smul.u32 128, %s326
        %p328 = scmp.lt.s32.totalorder %s323, 62
        %s329 = scalar_select %p328, %s323, 62
        %s330 = smul.addr %s329, 8
        %s331 = scalar_lea.vmem %s1, %s330
        %s332 = smul.u32 32, %s18
        %s333 = ssub.s32 63, %s332
        %p334 = scmp.lt.s32.totalorder %s333, 32
        %s335 = scalar_select %p334, %s333, 32
        %s336 = smul.u32 128, %s335
        %s337 = smul.u32 32, %s18
        %s338 = ssub.s32 63, %s337
        %p339 = scmp.lt.s32.totalorder %s338, 32
        %s340 = scalar_select %p339, %s338, 32
        %s341 = smul.u32 128, %s340
        %v342 = vld [vmem:[%s317] sm:$0xff]
        %v343 = vld [vmem:[%s317 + $0x8] sm:$0xff]
        %v344 = vld [vmem:[%s317 + $0x10] sm:$0xff]
        %v345 = vld [vmem:[%s317 + $0x18] sm:$0xff]
        %v346 = vld [vmem:[%s317 + $0x20] sm:$0xff]
        %v347 = vld [vmem:[%s317 + $0x28] sm:$0xff]
        %v348 = vld [vmem:[%s317 + $0x30] sm:$0xff]
        %v349 = vld [vmem:[%s317 + $0x38] sm:$0xff]
        %v350 = vld [vmem:[%s317 + $0x40] sm:$0xff]
        %v351 = vld [vmem:[%s317 + $0x48] sm:$0xff]
        %v352 = vld [vmem:[%s317 + $0x50] sm:$0xff]
        %v353 = vld [vmem:[%s317 + $0x58] sm:$0xff]
        %v354 = vld [vmem:[%s317 + $0x60] sm:$0xff]
        %v355 = vld [vmem:[%s317 + $0x68] sm:$0xff]
        %v356 = vld [vmem:[%s317 + $0x70] sm:$0xff]
        %v357 = vld [vmem:[%s317 + $0x78] sm:$0xff]
        %v358 = vld [vmem:[%s317 + $0x80] sm:$0xff]
        %v359 = vld [vmem:[%s317 + $0x88] sm:$0xff]
        %v360 = vld [vmem:[%s317 + $0x90] sm:$0xff]
        %v361 = vld [vmem:[%s317 + $0x98] sm:$0xff]
        %v362 = vld [vmem:[%s317 + $0xa0] sm:$0xff]
        %v363 = vld [vmem:[%s317 + $0xa8] sm:$0xff]
        %v364 = vld [vmem:[%s317 + $0xb0] sm:$0xff]
        %v365 = vld [vmem:[%s317 + $0xb8] sm:$0xff]
        %v366 = vld [vmem:[%s317 + $0xc0] sm:$0xff]
        %v367 = vld [vmem:[%s317 + $0xc8] sm:$0xff]
        %v368 = vld [vmem:[%s317 + $0xd0] sm:$0xff]
        %v369 = vld [vmem:[%s317 + $0xd8] sm:$0xff]
        %v370 = vld [vmem:[%s317 + $0xe0] sm:$0xff]
        %v371 = vld [vmem:[%s317 + $0xe8] sm:$0xff]
        %v372 = vld [vmem:[%s317 + $0xf0] sm:$0xff]
        %v373 = vld [vmem:[%s317 + $0xf8] sm:$0xff]
        %v374 = vld [vmem:[%s331] sm:$0xff]
        %v375 = vld [vmem:[%s331 + $0x8] sm:$0xff]
        %v376 = vld [vmem:[%s331 + $0x10] sm:$0xff]
        %v377 = vld [vmem:[%s331 + $0x18] sm:$0xff]
        %v378 = vld [vmem:[%s331 + $0x20] sm:$0xff]
        %v379 = vld [vmem:[%s331 + $0x28] sm:$0xff]
        %v380 = vld [vmem:[%s331 + $0x30] sm:$0xff]
        %v381 = vld [vmem:[%s331 + $0x38] sm:$0xff]
        %v382 = vld [vmem:[%s331 + $0x40] sm:$0xff]
        %v383 = vld [vmem:[%s331 + $0x48] sm:$0xff]
        %v384 = vld [vmem:[%s331 + $0x50] sm:$0xff]
        %v385 = vld [vmem:[%s331 + $0x58] sm:$0xff]
        %v386 = vld [vmem:[%s331 + $0x60] sm:$0xff]
        %v387 = vld [vmem:[%s331 + $0x68] sm:$0xff]
        %v388 = vld [vmem:[%s331 + $0x70] sm:$0xff]
        %v389 = vld [vmem:[%s331 + $0x78] sm:$0xff]
        %v390 = vld [vmem:[%s331 + $0x80] sm:$0xff]
        %v391 = vld [vmem:[%s331 + $0x88] sm:$0xff]
        %v392 = vld [vmem:[%s331 + $0x90] sm:$0xff]
        %v393 = vld [vmem:[%s331 + $0x98] sm:$0xff]
        %v394 = vld [vmem:[%s331 + $0xa0] sm:$0xff]
        %v395 = vld [vmem:[%s331 + $0xa8] sm:$0xff]
        %v396 = vld [vmem:[%s331 + $0xb0] sm:$0xff]
        %v397 = vld [vmem:[%s331 + $0xb8] sm:$0xff]
        %v398 = vld [vmem:[%s331 + $0xc0] sm:$0xff]
        %v399 = vld [vmem:[%s331 + $0xc8] sm:$0xff]
        %v400 = vld [vmem:[%s331 + $0xd0] sm:$0xff]
        %v401 = vld [vmem:[%s331 + $0xd8] sm:$0xff]
        %v402 = vld [vmem:[%s331 + $0xe0] sm:$0xff]
        %v403 = vld [vmem:[%s331 + $0xe8] sm:$0xff]
        %v404 = vld [vmem:[%s331 + $0xf0] sm:$0xff]
        %v405 = vld [vmem:[%s331 + $0xf8] sm:$0xff]
        %v406 = vld [vmem:[%s2] sm:$0xff]
        %v407 = vld [vmem:[%s2 + $0x8] sm:$0xff]
        %v408 = vld [vmem:[%s2 + $0x10] sm:$0xff]
        %v409 = vld [vmem:[%s2 + $0x18] sm:$0xff]
        %v410 = vld [vmem:[%s3] sm:$0x1]
        %v412 = vlaneseq
        %v413 = vshrl.u32 %v412, 7
        %v414 = vsub.s32 0, %v413
        %v415 = vrot.slane %v410, %v414
        %vm417 = vcmask 261120
        %v419 = vsel %vm417, %v342, 0
        %v422 = vsel %vm417, %v343, 0
        %v425 = vsel %vm417, %v344, 0
        %v428 = vsel %vm417, %v345, 0
        %v431 = vsel %vm417, %v346, 0
        %v434 = vsel %vm417, %v347, 0
        %v437 = vsel %vm417, %v348, 0
        %v440 = vsel %vm417, %v349, 0
        %v443 = vsel %vm417, %v350, 0
        %v446 = vsel %vm417, %v351, 0
        %v449 = vsel %vm417, %v352, 0
        %v452 = vsel %vm417, %v353, 0
        %v455 = vsel %vm417, %v354, 0
        %v458 = vsel %vm417, %v355, 0
        %v461 = vsel %vm417, %v356, 0
        %v464 = vsel %vm417, %v357, 0
        %v467 = vsel %vm417, %v358, 0
        %v470 = vsel %vm417, %v359, 0
        %v473 = vsel %vm417, %v360, 0
        %v476 = vsel %vm417, %v361, 0
        %v479 = vsel %vm417, %v362, 0
        %v482 = vsel %vm417, %v363, 0
        %v485 = vsel %vm417, %v364, 0
        %v488 = vsel %vm417, %v365, 0
        %v491 = vsel %vm417, %v366, 0
        %v494 = vsel %vm417, %v367, 0
        %v497 = vsel %vm417, %v368, 0
        %v500 = vsel %vm417, %v369, 0
        %v503 = vsel %vm417, %v370, 0
        %v506 = vsel %vm417, %v371, 0
        %v509 = vsel %vm417, %v372, 0
        %v512 = vsel %vm417, %v373, 0
        %514 = vmatprep.subr.mxu0 0.0
        %515 = vmatpush1.msra.mxu0 0.0
        %516 = vmatprep.subr.mxu0 0.0
        %517 = vmatpush1.msra.mxu0 0.0
        %518 = vmatprep.subr.mxu0 0.0
        %519 = vmatpush1.msra.mxu0 0.0
        %520 = vmatprep.subr.mxu0 0.0
        %521 = vmatpush1.msra.mxu0 0.0
        %522 = vmatprep.subr.mxu0 0.0
        %523 = vmatpush1.msra.mxu0 0.0
        %524 = vmatprep.subr.mxu0 0.0
        %525 = vmatpush1.msra.mxu0 0.0
        %526 = vmatprep.subr.mxu0 0.0
        %527 = vmatpush1.msra.mxu0 0.0
        %528 = vmatprep.subr.mxu0 0.0
        %529 = vmatpush1.msra.mxu0 0.0
        %530 = vmatprep.subr.mxu0 0.0
        %531 = vmatpush1.msra.mxu0 0.0
        %532 = vmatprep.subr.mxu0 0.0
        %533 = vmatpush1.msra.mxu0 0.0
        %534 = vmatprep.subr.mxu0 0.0
        %535 = vmatpush1.msra.mxu0 0.0
        %536 = vmatprep.subr.mxu0 0.0
        %537 = vmatpush1.msra.mxu0 0.0
        %538 = vmatprep.subr.mxu0 0.0
        %539 = vmatpush1.msra.mxu0 %v409
        %540 = vmatprep.subr.mxu0 0.0
        %541 = vmatpush1.msra.mxu0 %v408
        %542 = vmatprep.subr.mxu0 0.0
        %543 = vmatpush1.msra.mxu0 %v407
        %544 = vmatprep.subr.mxu0 0.0
        %545 = vmatpush1.msra.mxu0 %v406
        %546 = vmatprep.subr.mxu0 0.0
        %547 = vmatpush2.msra.mxu0 0.0
        %548 = vmatprep.subr.mxu0 0.0
        %549 = vmatpush2.msra.mxu0 0.0
        %550 = vmatprep.subr.mxu0 0.0
        %551 = vmatpush2.msra.mxu0 0.0
        %552 = vmatprep.subr.mxu0 0.0
        %553 = vmatpush2.msra.mxu0 0.0
        %554 = vmatprep.subr.mxu0 0.0
        %555 = vmatpush2.msra.mxu0 0.0
        %556 = vmatprep.subr.mxu0 0.0
        %557 = vmatpush2.msra.mxu0 0.0
        %558 = vmatprep.subr.mxu0 0.0
        %559 = vmatpush2.msra.mxu0 0.0
        %560 = vmatprep.subr.mxu0 0.0
        %561 = vmatpush2.msra.mxu0 0.0
        %562 = vmatprep.subr.mxu0 0.0
        %563 = vmatpush2.msra.mxu0 0.0
        %564 = vmatprep.subr.mxu0 0.0
        %565 = vmatpush2.msra.mxu0 0.0
        %566 = vmatprep.subr.mxu0 0.0
        %567 = vmatpush2.msra.mxu0 0.0
        %568 = vmatprep.subr.mxu0 0.0
        %569 = vmatpush2.msra.mxu0 0.0
        %570 = vmatprep.subr.mxu0 0.0
        %571 = vmatpush2.msra.mxu0 0.0
        %572 = vmatprep.subr.mxu0 0.0
        %573 = vmatpush2.msra.mxu0 0.0
        %574 = vmatprep.subr.mxu0 0.0
        %575 = vmatpush2.msra.mxu0 0.0
        %576 = vmatprep.subr.mxu0 0.0
        %577 = vmatpush2.msra.mxu0 0.0
        %578 = vmatprep.mubr.f32.mxu0 0.0
        %579 = vmatmul.mubr.f32.gmra.mxu0 %v419
        %v580 = vpop.f32.mrf.mxu0
        %v581 = vadd.f32 %v415, %v580
        %v582 = vpop.f32.mrf.mxu0
        %583 = vmatprep.mubr.f32.mxu0 0.0
        %584 = vmatmul.mubr.f32.gmra.mxu0 %v422
        %v585 = vpop.f32.mrf.mxu0
        %v586 = vadd.f32 %v415, %v585
        %v587 = vpop.f32.mrf.mxu0
        %588 = vmatprep.mubr.f32.mxu0 0.0
        %589 = vmatmul.mubr.f32.gmra.mxu0 %v425
        %v590 = vpop.f32.mrf.mxu0
        %v591 = vadd.f32 %v415, %v590
        %v592 = vpop.f32.mrf.mxu0
        %593 = vmatprep.mubr.f32.mxu0 0.0
        %594 = vmatmul.mubr.f32.gmra.mxu0 %v428
        %v595 = vpop.f32.mrf.mxu0
        %v596 = vadd.f32 %v415, %v595
        %v597 = vpop.f32.mrf.mxu0
        %598 = vmatprep.mubr.f32.mxu0 0.0
        %599 = vmatmul.mubr.f32.gmra.mxu0 %v431
        %v600 = vpop.f32.mrf.mxu0
        %v601 = vadd.f32 %v415, %v600
        %v602 = vpop.f32.mrf.mxu0
        %603 = vmatprep.mubr.f32.mxu0 0.0
        %604 = vmatmul.mubr.f32.gmra.mxu0 %v434
        %v605 = vpop.f32.mrf.mxu0
        %v606 = vadd.f32 %v415, %v605
        %v607 = vpop.f32.mrf.mxu0
        %608 = vmatprep.mubr.f32.mxu0 0.0
        %609 = vmatmul.mubr.f32.gmra.mxu0 %v437
        %v610 = vpop.f32.mrf.mxu0
        %v611 = vadd.f32 %v415, %v610
        %v612 = vpop.f32.mrf.mxu0
        %613 = vmatprep.mubr.f32.mxu0 0.0
        %614 = vmatmul.mubr.f32.gmra.mxu0 %v440
        %v615 = vpop.f32.mrf.mxu0
        %v616 = vadd.f32 %v415, %v615
        %v617 = vpop.f32.mrf.mxu0
        %618 = vmatprep.mubr.f32.mxu0 0.0
        %619 = vmatmul.mubr.f32.gmra.mxu0 %v443
        %v620 = vpop.f32.mrf.mxu0
        %v621 = vadd.f32 %v415, %v620
        %v622 = vpop.f32.mrf.mxu0
        %623 = vmatprep.mubr.f32.mxu0 0.0
        %624 = vmatmul.mubr.f32.gmra.mxu0 %v446
        %v625 = vpop.f32.mrf.mxu0
        %v626 = vadd.f32 %v415, %v625
        %v627 = vpop.f32.mrf.mxu0
        %628 = vmatprep.mubr.f32.mxu0 0.0
        %629 = vmatmul.mubr.f32.gmra.mxu0 %v449
        %v630 = vpop.f32.mrf.mxu0
        %v631 = vadd.f32 %v415, %v630
        %v632 = vpop.f32.mrf.mxu0
        %633 = vmatprep.mubr.f32.mxu0 0.0
        %634 = vmatmul.mubr.f32.gmra.mxu0 %v452
        %v635 = vpop.f32.mrf.mxu0
        %v636 = vadd.f32 %v415, %v635
        %v637 = vpop.f32.mrf.mxu0
        %638 = vmatprep.mubr.f32.mxu0 0.0
        %639 = vmatmul.mubr.f32.gmra.mxu0 %v455
        %v640 = vpop.f32.mrf.mxu0
        %v641 = vadd.f32 %v415, %v640
        %v642 = vpop.f32.mrf.mxu0
        %643 = vmatprep.mubr.f32.mxu0 0.0
        %644 = vmatmul.mubr.f32.gmra.mxu0 %v458
        %v645 = vpop.f32.mrf.mxu0
        %v646 = vadd.f32 %v415, %v645
        %v647 = vpop.f32.mrf.mxu0
        %648 = vmatprep.mubr.f32.mxu0 0.0
        %649 = vmatmul.mubr.f32.gmra.mxu0 %v461
        %v650 = vpop.f32.mrf.mxu0
        %v651 = vadd.f32 %v415, %v650
        %v652 = vpop.f32.mrf.mxu0
        %653 = vmatprep.mubr.f32.mxu0 0.0
        %654 = vmatmul.mubr.f32.gmra.mxu0 %v464
        %v655 = vpop.f32.mrf.mxu0
        %v656 = vadd.f32 %v415, %v655
        %v657 = vpop.f32.mrf.mxu0
        %658 = vmatprep.mubr.f32.mxu0 0.0
        %659 = vmatmul.mubr.f32.gmra.mxu0 %v467
        %v660 = vpop.f32.mrf.mxu0
        %v661 = vadd.f32 %v415, %v660
        %v662 = vpop.f32.mrf.mxu0
        %663 = vmatprep.mubr.f32.mxu0 0.0
        %664 = vmatmul.mubr.f32.gmra.mxu0 %v470
        %v665 = vpop.f32.mrf.mxu0
        %v666 = vadd.f32 %v415, %v665
        %v667 = vpop.f32.mrf.mxu0
        %668 = vmatprep.mubr.f32.mxu0 0.0
        %669 = vmatmul.mubr.f32.gmra.mxu0 %v473
        %v670 = vpop.f32.mrf.mxu0
        %v671 = vadd.f32 %v415, %v670
        %v672 = vpop.f32.mrf.mxu0
        %673 = vmatprep.mubr.f32.mxu0 0.0
        %674 = vmatmul.mubr.f32.gmra.mxu0 %v476
        %v675 = vpop.f32.mrf.mxu0
        %v676 = vadd.f32 %v415, %v675
        %v677 = vpop.f32.mrf.mxu0
        %678 = vmatprep.mubr.f32.mxu0 0.0
        %679 = vmatmul.mubr.f32.gmra.mxu0 %v479
        %v680 = vpop.f32.mrf.mxu0
        %v681 = vadd.f32 %v415, %v680
        %v682 = vpop.f32.mrf.mxu0
        %683 = vmatprep.mubr.f32.mxu0 0.0
        %684 = vmatmul.mubr.f32.gmra.mxu0 %v482
        %v685 = vpop.f32.mrf.mxu0
        %v686 = vadd.f32 %v415, %v685
        %v687 = vpop.f32.mrf.mxu0
        %688 = vmatprep.mubr.f32.mxu0 0.0
        %689 = vmatmul.mubr.f32.gmra.mxu0 %v485
        %v690 = vpop.f32.mrf.mxu0
        %v691 = vadd.f32 %v415, %v690
        %v692 = vpop.f32.mrf.mxu0
        %693 = vmatprep.mubr.f32.mxu0 0.0
        %694 = vmatmul.mubr.f32.gmra.mxu0 %v488
        %v695 = vpop.f32.mrf.mxu0
        %v696 = vadd.f32 %v415, %v695
        %v697 = vpop.f32.mrf.mxu0
        %698 = vmatprep.mubr.f32.mxu0 0.0
        %699 = vmatmul.mubr.f32.gmra.mxu0 %v491
        %v700 = vpop.f32.mrf.mxu0
        %v701 = vadd.f32 %v415, %v700
        %v702 = vpop.f32.mrf.mxu0
        %703 = vmatprep.mubr.f32.mxu0 0.0
        %704 = vmatmul.mubr.f32.gmra.mxu0 %v494
        %v705 = vpop.f32.mrf.mxu0
        %v706 = vadd.f32 %v415, %v705
        %v707 = vpop.f32.mrf.mxu0
        %708 = vmatprep.mubr.f32.mxu0 0.0
        %709 = vmatmul.mubr.f32.gmra.mxu0 %v497
        %v710 = vpop.f32.mrf.mxu0
        %v711 = vadd.f32 %v415, %v710
        %v712 = vpop.f32.mrf.mxu0
        %713 = vmatprep.mubr.f32.mxu0 0.0
        %714 = vmatmul.mubr.f32.gmra.mxu0 %v500
        %v715 = vpop.f32.mrf.mxu0
        %v716 = vadd.f32 %v415, %v715
        %v717 = vpop.f32.mrf.mxu0
        %718 = vmatprep.mubr.f32.mxu0 0.0
        %719 = vmatmul.mubr.f32.gmra.mxu0 %v503
        %v720 = vpop.f32.mrf.mxu0
        %v721 = vadd.f32 %v415, %v720
        %v722 = vpop.f32.mrf.mxu0
        %723 = vmatprep.mubr.f32.mxu0 0.0
        %724 = vmatmul.mubr.f32.gmra.mxu0 %v506
        %v725 = vpop.f32.mrf.mxu0
        %v726 = vadd.f32 %v415, %v725
        %v727 = vpop.f32.mrf.mxu0
        %728 = vmatprep.mubr.f32.mxu0 0.0
        %729 = vmatmul.mubr.f32.gmra.mxu0 %v509
        %v730 = vpop.f32.mrf.mxu0
        %v731 = vadd.f32 %v415, %v730
        %v732 = vpop.f32.mrf.mxu0
        %733 = vmatprep.mubr.f32.mxu0 0.0
        %734 = vmatmul.mubr.f32.gmra.mxu0 %v512
        %v735 = vpop.f32.mrf.mxu0
        %v736 = vadd.f32 %v415, %v735
        %v737 = vpop.f32.mrf.mxu0
        %738 = vdwg.mxu0
        %v739 = vxor.u32 %v581, 2147483648
        %v740 = vxor.u32 %v586, 2147483648
        %v741 = vxor.u32 %v591, 2147483648
        %v742 = vxor.u32 %v596, 2147483648
        %v743 = vxor.u32 %v601, 2147483648
        %v744 = vxor.u32 %v606, 2147483648
        %v745 = vxor.u32 %v611, 2147483648
        %v746 = vxor.u32 %v616, 2147483648
        %v747 = vxor.u32 %v621, 2147483648
        %v748 = vxor.u32 %v626, 2147483648
        %v749 = vxor.u32 %v631, 2147483648
        %v750 = vxor.u32 %v636, 2147483648
        %v751 = vxor.u32 %v641, 2147483648
        %v752 = vxor.u32 %v646, 2147483648
        %v753 = vxor.u32 %v651, 2147483648
        %v754 = vxor.u32 %v656, 2147483648
        %v755 = vxor.u32 %v661, 2147483648
        %v756 = vxor.u32 %v666, 2147483648
        %v757 = vxor.u32 %v671, 2147483648
        %v758 = vxor.u32 %v676, 2147483648
        %v759 = vxor.u32 %v681, 2147483648
        %v760 = vxor.u32 %v686, 2147483648
        %v761 = vxor.u32 %v691, 2147483648
        %v762 = vxor.u32 %v696, 2147483648
        %v763 = vxor.u32 %v701, 2147483648
        %v764 = vxor.u32 %v706, 2147483648
        %v765 = vxor.u32 %v711, 2147483648
        %v766 = vxor.u32 %v716, 2147483648
        %v767 = vxor.u32 %v721, 2147483648
        %v768 = vxor.u32 %v726, 2147483648
        %v769 = vxor.u32 %v731, 2147483648
        %v770 = vxor.u32 %v736, 2147483648
        %v771 = vmul.f32 %v739, 1.442695
        %v772 = vpow.pop %v771
        %v773 = vmul.f32 %v740, 1.442695
        %v774 = vpow.pop %v773
        %v775 = vmul.f32 %v741, 1.442695
        %v776 = vpow.pop %v775
        %v777 = vmul.f32 %v742, 1.442695
        %v778 = vpow.pop %v777
        %v779 = vmul.f32 %v743, 1.442695
        %v780 = vpow.pop %v779
        %v781 = vmul.f32 %v744, 1.442695
        %v782 = vpow.pop %v781
        %v783 = vmul.f32 %v745, 1.442695
        %v784 = vpow.pop %v783
        %v785 = vmul.f32 %v746, 1.442695
        %v786 = vpow.pop %v785
        %v787 = vmul.f32 %v747, 1.442695
        %v788 = vpow.pop %v787
        %v789 = vmul.f32 %v748, 1.442695
        %v790 = vpow.pop %v789
        %v791 = vmul.f32 %v749, 1.442695
        %v792 = vpow.pop %v791
        %v793 = vmul.f32 %v750, 1.442695
        %v794 = vpow.pop %v793
        %v795 = vmul.f32 %v751, 1.442695
        %v796 = vpow.pop %v795
        %v797 = vmul.f32 %v752, 1.442695
        %v798 = vpow.pop %v797
        %v799 = vmul.f32 %v753, 1.442695
        %v800 = vpow.pop %v799
        %v801 = vmul.f32 %v754, 1.442695
        %v802 = vpow.pop %v801
        %v803 = vmul.f32 %v755, 1.442695
        %v804 = vpow.pop %v803
        %v805 = vmul.f32 %v756, 1.442695
        %v806 = vpow.pop %v805
        %v807 = vmul.f32 %v757, 1.442695
        %v808 = vpow.pop %v807
        %v809 = vmul.f32 %v758, 1.442695
        %v810 = vpow.pop %v809
        %v811 = vmul.f32 %v759, 1.442695
        %v812 = vpow.pop %v811
        %v813 = vmul.f32 %v760, 1.442695
        %v814 = vpow.pop %v813
        %v815 = vmul.f32 %v761, 1.442695
        %v816 = vpow.pop %v815
        %v817 = vmul.f32 %v762, 1.442695
        %v818 = vpow.pop %v817
        %v819 = vmul.f32 %v763, 1.442695
        %v820 = vpow.pop %v819
        %v821 = vmul.f32 %v764, 1.442695
        %v822 = vpow.pop %v821
        %v823 = vmul.f32 %v765, 1.442695
        %v824 = vpow.pop %v823
        %v825 = vmul.f32 %v766, 1.442695
        %v826 = vpow.pop %v825
        %v827 = vmul.f32 %v767, 1.442695
        %v828 = vpow.pop %v827
        %v829 = vmul.f32 %v768, 1.442695
        %v830 = vpow.pop %v829
        %v831 = vmul.f32 %v769, 1.442695
        %v832 = vpow.pop %v831
        %v833 = vmul.f32 %v770, 1.442695
        %v834 = vpow.pop %v833
        %v835 = vadd.f32 %v772, 1.0
        %v836 = vadd.f32 %v774, 1.0
        %v837 = vadd.f32 %v776, 1.0
        %v838 = vadd.f32 %v778, 1.0
        %v839 = vadd.f32 %v780, 1.0
        %v840 = vadd.f32 %v782, 1.0
        %v841 = vadd.f32 %v784, 1.0
        %v842 = vadd.f32 %v786, 1.0
        %v843 = vadd.f32 %v788, 1.0
        %v844 = vadd.f32 %v790, 1.0
        %v845 = vadd.f32 %v792, 1.0
        %v846 = vadd.f32 %v794, 1.0
        %v847 = vadd.f32 %v796, 1.0
        %v848 = vadd.f32 %v798, 1.0
        %v849 = vadd.f32 %v800, 1.0
        %v850 = vadd.f32 %v802, 1.0
        %v851 = vadd.f32 %v804, 1.0
        %v852 = vadd.f32 %v806, 1.0
        %v853 = vadd.f32 %v808, 1.0
        %v854 = vadd.f32 %v810, 1.0
        %v855 = vadd.f32 %v812, 1.0
        %v856 = vadd.f32 %v814, 1.0
        %v857 = vadd.f32 %v816, 1.0
        %v858 = vadd.f32 %v818, 1.0
        %v859 = vadd.f32 %v820, 1.0
        %v860 = vadd.f32 %v822, 1.0
        %v861 = vadd.f32 %v824, 1.0
        %v862 = vadd.f32 %v826, 1.0
        %v863 = vadd.f32 %v828, 1.0
        %v864 = vadd.f32 %v830, 1.0
        %v865 = vadd.f32 %v832, 1.0
        %v866 = vadd.f32 %v834, 1.0
        %v867 = vrcp.pop %v835
        %v868 = vmul.f32 1.0, %v867
        %v869 = vrcp.pop %v836
        %v870 = vmul.f32 1.0, %v869
        %v871 = vrcp.pop %v837
        %v872 = vmul.f32 1.0, %v871
        %v873 = vrcp.pop %v838
        %v874 = vmul.f32 1.0, %v873
        %v875 = vrcp.pop %v839
        %v876 = vmul.f32 1.0, %v875
        %v877 = vrcp.pop %v840
        %v878 = vmul.f32 1.0, %v877
        %v879 = vrcp.pop %v841
        %v880 = vmul.f32 1.0, %v879
        %v881 = vrcp.pop %v842
        %v882 = vmul.f32 1.0, %v881
        %v883 = vrcp.pop %v843
        %v884 = vmul.f32 1.0, %v883
        %v885 = vrcp.pop %v844
        %v886 = vmul.f32 1.0, %v885
        %v887 = vrcp.pop %v845
        %v888 = vmul.f32 1.0, %v887
        %v889 = vrcp.pop %v846
        %v890 = vmul.f32 1.0, %v889
        %v891 = vrcp.pop %v847
        %v892 = vmul.f32 1.0, %v891
        %v893 = vrcp.pop %v848
        %v894 = vmul.f32 1.0, %v893
        %v895 = vrcp.pop %v849
        %v896 = vmul.f32 1.0, %v895
        %v897 = vrcp.pop %v850
        %v898 = vmul.f32 1.0, %v897
        %v899 = vrcp.pop %v851
        %v900 = vmul.f32 1.0, %v899
        %v901 = vrcp.pop %v852
        %v902 = vmul.f32 1.0, %v901
        %v903 = vrcp.pop %v853
        %v904 = vmul.f32 1.0, %v903
        %v905 = vrcp.pop %v854
        %v906 = vmul.f32 1.0, %v905
        %v907 = vrcp.pop %v855
        %v908 = vmul.f32 1.0, %v907
        %v909 = vrcp.pop %v856
        %v910 = vmul.f32 1.0, %v909
        %v911 = vrcp.pop %v857
        %v912 = vmul.f32 1.0, %v911
        %v913 = vrcp.pop %v858
        %v914 = vmul.f32 1.0, %v913
        %v915 = vrcp.pop %v859
        %v916 = vmul.f32 1.0, %v915
        %v917 = vrcp.pop %v860
        %v918 = vmul.f32 1.0, %v917
        %v919 = vrcp.pop %v861
        %v920 = vmul.f32 1.0, %v919
        %v921 = vrcp.pop %v862
        %v922 = vmul.f32 1.0, %v921
        %v923 = vrcp.pop %v863
        %v924 = vmul.f32 1.0, %v923
        %v925 = vrcp.pop %v864
        %v926 = vmul.f32 1.0, %v925
        %v927 = vrcp.pop %v865
        %v928 = vmul.f32 1.0, %v927
        %v929 = vrcp.pop %v866
        %v930 = vmul.f32 1.0, %v929
        %v931 = vmul.f32 %v581, %v868
        %v932 = vmul.f32 %v586, %v870
        %v933 = vmul.f32 %v591, %v872
        %v934 = vmul.f32 %v596, %v874
        %v935 = vmul.f32 %v601, %v876
        %v936 = vmul.f32 %v606, %v878
        %v937 = vmul.f32 %v611, %v880
        %v938 = vmul.f32 %v616, %v882
        %v939 = vmul.f32 %v621, %v884
        %v940 = vmul.f32 %v626, %v886
        %v941 = vmul.f32 %v631, %v888
        %v942 = vmul.f32 %v636, %v890
        %v943 = vmul.f32 %v641, %v892
        %v944 = vmul.f32 %v646, %v894
        %v945 = vmul.f32 %v651, %v896
        %v946 = vmul.f32 %v656, %v898
        %v947 = vmul.f32 %v661, %v900
        %v948 = vmul.f32 %v666, %v902
        %v949 = vmul.f32 %v671, %v904
        %v950 = vmul.f32 %v676, %v906
        %v951 = vmul.f32 %v681, %v908
        %v952 = vmul.f32 %v686, %v910
        %v953 = vmul.f32 %v691, %v912
        %v954 = vmul.f32 %v696, %v914
        %v955 = vmul.f32 %v701, %v916
        %v956 = vmul.f32 %v706, %v918
        %v957 = vmul.f32 %v711, %v920
        %v958 = vmul.f32 %v716, %v922
        %v959 = vmul.f32 %v721, %v924
        %v960 = vmul.f32 %v726, %v926
        %v961 = vmul.f32 %v731, %v928
        %v962 = vmul.f32 %v736, %v930
        %v963 = vld [vmem:[%s4] sm:$0xff]
        %v964 = vld [vmem:[%s4 + $0x8] sm:$0xff]
        %v965 = vld [vmem:[%s4 + $0x10] sm:$0xff]
        %v966 = vld [vmem:[%s4 + $0x18] sm:$0xff]
        %v967 = vld [vmem:[%s5] sm:$0x1]
        %v969 = vlaneseq
        %v970 = vshrl.u32 %v969, 7
        %v971 = vsub.s32 0, %v970
        %v972 = vrot.slane %v967, %v971
        %v975 = vsel %vm417, %v931, 0
        %v978 = vsel %vm417, %v932, 0
        %v981 = vsel %vm417, %v933, 0
        %v984 = vsel %vm417, %v934, 0
        %v987 = vsel %vm417, %v935, 0
        %v990 = vsel %vm417, %v936, 0
        %v993 = vsel %vm417, %v937, 0
        %v996 = vsel %vm417, %v938, 0
        %v999 = vsel %vm417, %v939, 0
        %v1002 = vsel %vm417, %v940, 0
        %v1005 = vsel %vm417, %v941, 0
        %v1008 = vsel %vm417, %v942, 0
        %v1011 = vsel %vm417, %v943, 0
        %v1014 = vsel %vm417, %v944, 0
        %v1017 = vsel %vm417, %v945, 0
        %v1020 = vsel %vm417, %v946, 0
        %v1023 = vsel %vm417, %v947, 0
        %v1026 = vsel %vm417, %v948, 0
        %v1029 = vsel %vm417, %v949, 0
        %v1032 = vsel %vm417, %v950, 0
        %v1035 = vsel %vm417, %v951, 0
        %v1038 = vsel %vm417, %v952, 0
        %v1041 = vsel %vm417, %v953, 0
        %v1044 = vsel %vm417, %v954, 0
        %v1047 = vsel %vm417, %v955, 0
        %v1050 = vsel %vm417, %v956, 0
        %v1053 = vsel %vm417, %v957, 0
        %v1056 = vsel %vm417, %v958, 0
        %v1059 = vsel %vm417, %v959, 0
        %v1062 = vsel %vm417, %v960, 0
        %v1065 = vsel %vm417, %v961, 0
        %v1068 = vsel %vm417, %v962, 0
        %1070 = vmatprep.subr.mxu0 0.0
        %1071 = vmatpush1.msra.mxu0 0.0
        %1072 = vmatprep.subr.mxu0 0.0
        %1073 = vmatpush1.msra.mxu0 0.0
        %1074 = vmatprep.subr.mxu0 0.0
        %1075 = vmatpush1.msra.mxu0 0.0
        %1076 = vmatprep.subr.mxu0 0.0
        %1077 = vmatpush1.msra.mxu0 0.0
        %1078 = vmatprep.subr.mxu0 0.0
        %1079 = vmatpush1.msra.mxu0 0.0
        %1080 = vmatprep.subr.mxu0 0.0
        %1081 = vmatpush1.msra.mxu0 0.0
        %1082 = vmatprep.subr.mxu0 0.0
        %1083 = vmatpush1.msra.mxu0 0.0
        %1084 = vmatprep.subr.mxu0 0.0
        %1085 = vmatpush1.msra.mxu0 0.0
        %1086 = vmatprep.subr.mxu0 0.0
        %1087 = vmatpush1.msra.mxu0 0.0
        %1088 = vmatprep.subr.mxu0 0.0
        %1089 = vmatpush1.msra.mxu0 0.0
        %1090 = vmatprep.subr.mxu0 0.0
        %1091 = vmatpush1.msra.mxu0 0.0
        %1092 = vmatprep.subr.mxu0 0.0
        %1093 = vmatpush1.msra.mxu0 0.0
        %1094 = vmatprep.subr.mxu0 0.0
        %1095 = vmatpush1.msra.mxu0 %v966
        %1096 = vmatprep.subr.mxu0 0.0
        %1097 = vmatpush1.msra.mxu0 %v965
        %1098 = vmatprep.subr.mxu0 0.0
        %1099 = vmatpush1.msra.mxu0 %v964
        %1100 = vmatprep.subr.mxu0 0.0
        %1101 = vmatpush1.msra.mxu0 %v963
        %1102 = vmatprep.subr.mxu0 0.0
        %1103 = vmatpush2.msra.mxu0 0.0
        %1104 = vmatprep.subr.mxu0 0.0
        %1105 = vmatpush2.msra.mxu0 0.0
        %1106 = vmatprep.subr.mxu0 0.0
        %1107 = vmatpush2.msra.mxu0 0.0
        %1108 = vmatprep.subr.mxu0 0.0
        %1109 = vmatpush2.msra.mxu0 0.0
        %1110 = vmatprep.subr.mxu0 0.0
        %1111 = vmatpush2.msra.mxu0 0.0
        %1112 = vmatprep.subr.mxu0 0.0
        %1113 = vmatpush2.msra.mxu0 0.0
        %1114 = vmatprep.subr.mxu0 0.0
        %1115 = vmatpush2.msra.mxu0 0.0
        %1116 = vmatprep.subr.mxu0 0.0
        %1117 = vmatpush2.msra.mxu0 0.0
        %1118 = vmatprep.subr.mxu0 0.0
        %1119 = vmatpush2.msra.mxu0 0.0
        %1120 = vmatprep.subr.mxu0 0.0
        %1121 = vmatpush2.msra.mxu0 0.0
        %1122 = vmatprep.subr.mxu0 0.0
        %1123 = vmatpush2.msra.mxu0 0.0
        %1124 = vmatprep.subr.mxu0 0.0
        %1125 = vmatpush2.msra.mxu0 0.0
        %1126 = vmatprep.subr.mxu0 0.0
        %1127 = vmatpush2.msra.mxu0 0.0
        %1128 = vmatprep.subr.mxu0 0.0
        %1129 = vmatpush2.msra.mxu0 0.0
        %1130 = vmatprep.subr.mxu0 0.0
        %1131 = vmatpush2.msra.mxu0 0.0
        %1132 = vmatprep.subr.mxu0 0.0
        %1133 = vmatpush2.msra.mxu0 0.0
        %1134 = vmatprep.mubr.f32.mxu0 0.0
        %1135 = vmatmul.mubr.f32.gmra.mxu0 %v975
        %v1136 = vpop.f32.mrf.mxu0
        %v1137 = vadd.f32 %v972, %v1136
        %v1138 = vpop.f32.mrf.mxu0
        %1139 = vmatprep.mubr.f32.mxu0 0.0
        %1140 = vmatmul.mubr.f32.gmra.mxu0 %v978
        %v1141 = vpop.f32.mrf.mxu0
        %v1142 = vadd.f32 %v972, %v1141
        %v1143 = vpop.f32.mrf.mxu0
        %1144 = vmatprep.mubr.f32.mxu0 0.0
        %1145 = vmatmul.mubr.f32.gmra.mxu0 %v981
        %v1146 = vpop.f32.mrf.mxu0
        %v1147 = vadd.f32 %v972, %v1146
        %v1148 = vpop.f32.mrf.mxu0
        %1149 = vmatprep.mubr.f32.mxu0 0.0
        %1150 = vmatmul.mubr.f32.gmra.mxu0 %v984
        %v1151 = vpop.f32.mrf.mxu0
        %v1152 = vadd.f32 %v972, %v1151
        %v1153 = vpop.f32.mrf.mxu0
        %1154 = vmatprep.mubr.f32.mxu0 0.0
        %1155 = vmatmul.mubr.f32.gmra.mxu0 %v987
        %v1156 = vpop.f32.mrf.mxu0
        %v1157 = vadd.f32 %v972, %v1156
        %v1158 = vpop.f32.mrf.mxu0
        %1159 = vmatprep.mubr.f32.mxu0 0.0
        %1160 = vmatmul.mubr.f32.gmra.mxu0 %v990
        %v1161 = vpop.f32.mrf.mxu0
        %v1162 = vadd.f32 %v972, %v1161
        %v1163 = vpop.f32.mrf.mxu0
        %1164 = vmatprep.mubr.f32.mxu0 0.0
        %1165 = vmatmul.mubr.f32.gmra.mxu0 %v993
        %v1166 = vpop.f32.mrf.mxu0
        %v1167 = vadd.f32 %v972, %v1166
        %v1168 = vpop.f32.mrf.mxu0
        %1169 = vmatprep.mubr.f32.mxu0 0.0
        %1170 = vmatmul.mubr.f32.gmra.mxu0 %v996
        %v1171 = vpop.f32.mrf.mxu0
        %v1172 = vadd.f32 %v972, %v1171
        %v1173 = vpop.f32.mrf.mxu0
        %1174 = vmatprep.mubr.f32.mxu0 0.0
        %1175 = vmatmul.mubr.f32.gmra.mxu0 %v999
        %v1176 = vpop.f32.mrf.mxu0
        %v1177 = vadd.f32 %v972, %v1176
        %v1178 = vpop.f32.mrf.mxu0
        %1179 = vmatprep.mubr.f32.mxu0 0.0
        %1180 = vmatmul.mubr.f32.gmra.mxu0 %v1002
        %v1181 = vpop.f32.mrf.mxu0
        %v1182 = vadd.f32 %v972, %v1181
        %v1183 = vpop.f32.mrf.mxu0
        %1184 = vmatprep.mubr.f32.mxu0 0.0
        %1185 = vmatmul.mubr.f32.gmra.mxu0 %v1005
        %v1186 = vpop.f32.mrf.mxu0
        %v1187 = vadd.f32 %v972, %v1186
        %v1188 = vpop.f32.mrf.mxu0
        %1189 = vmatprep.mubr.f32.mxu0 0.0
        %1190 = vmatmul.mubr.f32.gmra.mxu0 %v1008
        %v1191 = vpop.f32.mrf.mxu0
        %v1192 = vadd.f32 %v972, %v1191
        %v1193 = vpop.f32.mrf.mxu0
        %1194 = vmatprep.mubr.f32.mxu0 0.0
        %1195 = vmatmul.mubr.f32.gmra.mxu0 %v1011
        %v1196 = vpop.f32.mrf.mxu0
        %v1197 = vadd.f32 %v972, %v1196
        %v1198 = vpop.f32.mrf.mxu0
        %1199 = vmatprep.mubr.f32.mxu0 0.0
        %1200 = vmatmul.mubr.f32.gmra.mxu0 %v1014
        %v1201 = vpop.f32.mrf.mxu0
        %v1202 = vadd.f32 %v972, %v1201
        %v1203 = vpop.f32.mrf.mxu0
        %1204 = vmatprep.mubr.f32.mxu0 0.0
        %1205 = vmatmul.mubr.f32.gmra.mxu0 %v1017
        %v1206 = vpop.f32.mrf.mxu0
        %v1207 = vadd.f32 %v972, %v1206
        %v1208 = vpop.f32.mrf.mxu0
        %1209 = vmatprep.mubr.f32.mxu0 0.0
        %1210 = vmatmul.mubr.f32.gmra.mxu0 %v1020
        %v1211 = vpop.f32.mrf.mxu0
        %v1212 = vadd.f32 %v972, %v1211
        %v1213 = vpop.f32.mrf.mxu0
        %1214 = vmatprep.mubr.f32.mxu0 0.0
        %1215 = vmatmul.mubr.f32.gmra.mxu0 %v1023
        %v1216 = vpop.f32.mrf.mxu0
        %v1217 = vadd.f32 %v972, %v1216
        %v1218 = vpop.f32.mrf.mxu0
        %1219 = vmatprep.mubr.f32.mxu0 0.0
        %1220 = vmatmul.mubr.f32.gmra.mxu0 %v1026
        %v1221 = vpop.f32.mrf.mxu0
        %v1222 = vadd.f32 %v972, %v1221
        %v1223 = vpop.f32.mrf.mxu0
        %1224 = vmatprep.mubr.f32.mxu0 0.0
        %1225 = vmatmul.mubr.f32.gmra.mxu0 %v1029
        %v1226 = vpop.f32.mrf.mxu0
        %v1227 = vadd.f32 %v972, %v1226
        %v1228 = vpop.f32.mrf.mxu0
        %1229 = vmatprep.mubr.f32.mxu0 0.0
        %1230 = vmatmul.mubr.f32.gmra.mxu0 %v1032
        %v1231 = vpop.f32.mrf.mxu0
        %v1232 = vadd.f32 %v972, %v1231
        %v1233 = vpop.f32.mrf.mxu0
        %1234 = vmatprep.mubr.f32.mxu0 0.0
        %1235 = vmatmul.mubr.f32.gmra.mxu0 %v1035
        %v1236 = vpop.f32.mrf.mxu0
        %v1237 = vadd.f32 %v972, %v1236
        %v1238 = vpop.f32.mrf.mxu0
        %1239 = vmatprep.mubr.f32.mxu0 0.0
        %1240 = vmatmul.mubr.f32.gmra.mxu0 %v1038
        %v1241 = vpop.f32.mrf.mxu0
        %v1242 = vadd.f32 %v972, %v1241
        %v1243 = vpop.f32.mrf.mxu0
        %1244 = vmatprep.mubr.f32.mxu0 0.0
        %1245 = vmatmul.mubr.f32.gmra.mxu0 %v1041
        %v1246 = vpop.f32.mrf.mxu0
        %v1247 = vadd.f32 %v972, %v1246
        %v1248 = vpop.f32.mrf.mxu0
        %1249 = vmatprep.mubr.f32.mxu0 0.0
        %1250 = vmatmul.mubr.f32.gmra.mxu0 %v1044
        %v1251 = vpop.f32.mrf.mxu0
        %v1252 = vadd.f32 %v972, %v1251
        %v1253 = vpop.f32.mrf.mxu0
        %1254 = vmatprep.mubr.f32.mxu0 0.0
        %1255 = vmatmul.mubr.f32.gmra.mxu0 %v1047
        %v1256 = vpop.f32.mrf.mxu0
        %v1257 = vadd.f32 %v972, %v1256
        %v1258 = vpop.f32.mrf.mxu0
        %1259 = vmatprep.mubr.f32.mxu0 0.0
        %1260 = vmatmul.mubr.f32.gmra.mxu0 %v1050
        %v1261 = vpop.f32.mrf.mxu0
        %v1262 = vadd.f32 %v972, %v1261
        %v1263 = vpop.f32.mrf.mxu0
        %1264 = vmatprep.mubr.f32.mxu0 0.0
        %1265 = vmatmul.mubr.f32.gmra.mxu0 %v1053
        %v1266 = vpop.f32.mrf.mxu0
        %v1267 = vadd.f32 %v972, %v1266
        %v1268 = vpop.f32.mrf.mxu0
        %1269 = vmatprep.mubr.f32.mxu0 0.0
        %1270 = vmatmul.mubr.f32.gmra.mxu0 %v1056
        %v1271 = vpop.f32.mrf.mxu0
        %v1272 = vadd.f32 %v972, %v1271
        %v1273 = vpop.f32.mrf.mxu0
        %1274 = vmatprep.mubr.f32.mxu0 0.0
        %1275 = vmatmul.mubr.f32.gmra.mxu0 %v1059
        %v1276 = vpop.f32.mrf.mxu0
        %v1277 = vadd.f32 %v972, %v1276
        %v1278 = vpop.f32.mrf.mxu0
        %1279 = vmatprep.mubr.f32.mxu0 0.0
        %1280 = vmatmul.mubr.f32.gmra.mxu0 %v1062
        %v1281 = vpop.f32.mrf.mxu0
        %v1282 = vadd.f32 %v972, %v1281
        %v1283 = vpop.f32.mrf.mxu0
        %1284 = vmatprep.mubr.f32.mxu0 0.0
        %1285 = vmatmul.mubr.f32.gmra.mxu0 %v1065
        %v1286 = vpop.f32.mrf.mxu0
        %v1287 = vadd.f32 %v972, %v1286
        %v1288 = vpop.f32.mrf.mxu0
        %1289 = vmatprep.mubr.f32.mxu0 0.0
        %1290 = vmatmul.mubr.f32.gmra.mxu0 %v1068
        %v1291 = vpop.f32.mrf.mxu0
        %v1292 = vadd.f32 %v972, %v1291
        %v1293 = vpop.f32.mrf.mxu0
        %1294 = vdwg.mxu0
        %v1295 = vld [vmem:[%s6] sm:$0xff]
        %v1296 = vld [vmem:[%s6 + $0x8] sm:$0xff]
        %v1297 = vld [vmem:[%s6 + $0x10] sm:$0xff]
        %v1298 = vld [vmem:[%s6 + $0x18] sm:$0xff]
        %v1299 = vld [vmem:[%s6 + $0x20] sm:$0xff]
        %v1300 = vld [vmem:[%s6 + $0x28] sm:$0xff]
        %v1301 = vld [vmem:[%s6 + $0x30] sm:$0xff]
        %v1302 = vld [vmem:[%s6 + $0x38] sm:$0xff]
        %v1303 = vld [vmem:[%s6 + $0x40] sm:$0xff]
        %v1304 = vld [vmem:[%s6 + $0x48] sm:$0xff]
        %v1305 = vld [vmem:[%s6 + $0x50] sm:$0xff]
        %v1306 = vld [vmem:[%s6 + $0x58] sm:$0xff]
        %vm1307 = vcmask 785408
        %v1309 = vsel %vm1307, %v374, 0
        %v1312 = vsel %vm1307, %v375, 0
        %v1315 = vsel %vm1307, %v376, 0
        %v1318 = vsel %vm1307, %v377, 0
        %v1321 = vsel %vm1307, %v378, 0
        %v1324 = vsel %vm1307, %v379, 0
        %v1327 = vsel %vm1307, %v380, 0
        %v1330 = vsel %vm1307, %v381, 0
        %v1333 = vsel %vm1307, %v382, 0
        %v1336 = vsel %vm1307, %v383, 0
        %v1339 = vsel %vm1307, %v384, 0
        %v1342 = vsel %vm1307, %v385, 0
        %v1345 = vsel %vm1307, %v386, 0
        %v1348 = vsel %vm1307, %v387, 0
        %v1351 = vsel %vm1307, %v388, 0
        %v1354 = vsel %vm1307, %v389, 0
        %v1357 = vsel %vm1307, %v390, 0
        %v1360 = vsel %vm1307, %v391, 0
        %v1363 = vsel %vm1307, %v392, 0
        %v1366 = vsel %vm1307, %v393, 0
        %v1369 = vsel %vm1307, %v394, 0
        %v1372 = vsel %vm1307, %v395, 0
        %v1375 = vsel %vm1307, %v396, 0
        %v1378 = vsel %vm1307, %v397, 0
        %v1381 = vsel %vm1307, %v398, 0
        %v1384 = vsel %vm1307, %v399, 0
        %v1387 = vsel %vm1307, %v400, 0
        %v1390 = vsel %vm1307, %v401, 0
        %v1393 = vsel %vm1307, %v402, 0
        %v1396 = vsel %vm1307, %v403, 0
        %v1399 = vsel %vm1307, %v404, 0
        %v1402 = vsel %vm1307, %v405, 0
        %1404 = vmatprep.subr.mxu0 0.0
        %1405 = vmatpush1.msra.mxu0 0.0
        %1406 = vmatprep.subr.mxu0 0.0
        %1407 = vmatpush1.msra.mxu0 0.0
        %1408 = vmatprep.subr.mxu0 0.0
        %1409 = vmatpush1.msra.mxu0 0.0
        %1410 = vmatprep.subr.mxu0 0.0
        %1411 = vmatpush1.msra.mxu0 0.0
        %1412 = vmatprep.subr.mxu0 0.0
        %1413 = vmatpush1.msra.mxu0 %v1306
        %1414 = vmatprep.subr.mxu0 0.0
        %1415 = vmatpush1.msra.mxu0 %v1305
        %1416 = vmatprep.subr.mxu0 0.0
        %1417 = vmatpush1.msra.mxu0 %v1304
        %1418 = vmatprep.subr.mxu0 0.0
        %1419 = vmatpush1.msra.mxu0 %v1303
        %1420 = vmatprep.subr.mxu0 0.0
        %1421 = vmatpush1.msra.mxu0 %v1302
        %1422 = vmatprep.subr.mxu0 0.0
        %1423 = vmatpush1.msra.mxu0 %v1301
        %1424 = vmatprep.subr.mxu0 0.0
        %1425 = vmatpush1.msra.mxu0 %v1300
        %1426 = vmatprep.subr.mxu0 0.0
        %1427 = vmatpush1.msra.mxu0 %v1299
        %1428 = vmatprep.subr.mxu0 0.0
        %1429 = vmatpush1.msra.mxu0 %v1298
        %1430 = vmatprep.subr.mxu0 0.0
        %1431 = vmatpush1.msra.mxu0 %v1297
        %1432 = vmatprep.subr.mxu0 0.0
        %1433 = vmatpush1.msra.mxu0 %v1296
        %1434 = vmatprep.subr.mxu0 0.0
        %1435 = vmatpush1.msra.mxu0 %v1295
        %1436 = vmatprep.subr.mxu0 0.0
        %1437 = vmatpush2.msra.mxu0 0.0
        %1438 = vmatprep.subr.mxu0 0.0
        %1439 = vmatpush2.msra.mxu0 0.0
        %1440 = vmatprep.subr.mxu0 0.0
        %1441 = vmatpush2.msra.mxu0 0.0
        %1442 = vmatprep.subr.mxu0 0.0
        %1443 = vmatpush2.msra.mxu0 0.0
        %1444 = vmatprep.subr.mxu0 0.0
        %1445 = vmatpush2.msra.mxu0 0.0
        %1446 = vmatprep.subr.mxu0 0.0
        %1447 = vmatpush2.msra.mxu0 0.0
        %1448 = vmatprep.subr.mxu0 0.0
        %1449 = vmatpush2.msra.mxu0 0.0
        %1450 = vmatprep.subr.mxu0 0.0
        %1451 = vmatpush2.msra.mxu0 0.0
        %1452 = vmatprep.subr.mxu0 0.0
        %1453 = vmatpush2.msra.mxu0 0.0
        %1454 = vmatprep.subr.mxu0 0.0
        %1455 = vmatpush2.msra.mxu0 0.0
        %1456 = vmatprep.subr.mxu0 0.0
        %1457 = vmatpush2.msra.mxu0 0.0
        %1458 = vmatprep.subr.mxu0 0.0
        %1459 = vmatpush2.msra.mxu0 0.0
        %1460 = vmatprep.subr.mxu0 0.0
        %1461 = vmatpush2.msra.mxu0 0.0
        %1462 = vmatprep.subr.mxu0 0.0
        %1463 = vmatpush2.msra.mxu0 0.0
        %1464 = vmatprep.subr.mxu0 0.0
        %1465 = vmatpush2.msra.mxu0 0.0
        %1466 = vmatprep.subr.mxu0 0.0
        %1467 = vmatpush2.msra.mxu0 0.0
        %1468 = vmatprep.mubr.f32.mxu0 0.0
        %1469 = vmatmul.mubr.f32.gmra.mxu0 %v1309
        %v1470 = vpop.f32.mrf.mxu0
        %v1471 = vadd.f32 0.0, %v1470
        %v1472 = vpop.f32.mrf.mxu0
        %1473 = vmatprep.mubr.f32.mxu0 0.0
        %1474 = vmatmul.mubr.f32.gmra.mxu0 %v1312
        %v1475 = vpop.f32.mrf.mxu0
        %v1476 = vadd.f32 0.0, %v1475
        %v1477 = vpop.f32.mrf.mxu0
        %1478 = vmatprep.mubr.f32.mxu0 0.0
        %1479 = vmatmul.mubr.f32.gmra.mxu0 %v1315
        %v1480 = vpop.f32.mrf.mxu0
        %v1481 = vadd.f32 0.0, %v1480
        %v1482 = vpop.f32.mrf.mxu0
        %1483 = vmatprep.mubr.f32.mxu0 0.0
        %1484 = vmatmul.mubr.f32.gmra.mxu0 %v1318
        %v1485 = vpop.f32.mrf.mxu0
        %v1486 = vadd.f32 0.0, %v1485
        %v1487 = vpop.f32.mrf.mxu0
        %1488 = vmatprep.mubr.f32.mxu0 0.0
        %1489 = vmatmul.mubr.f32.gmra.mxu0 %v1321
        %v1490 = vpop.f32.mrf.mxu0
        %v1491 = vadd.f32 0.0, %v1490
        %v1492 = vpop.f32.mrf.mxu0
        %1493 = vmatprep.mubr.f32.mxu0 0.0
        %1494 = vmatmul.mubr.f32.gmra.mxu0 %v1324
        %v1495 = vpop.f32.mrf.mxu0
        %v1496 = vadd.f32 0.0, %v1495
        %v1497 = vpop.f32.mrf.mxu0
        %1498 = vmatprep.mubr.f32.mxu0 0.0
        %1499 = vmatmul.mubr.f32.gmra.mxu0 %v1327
        %v1500 = vpop.f32.mrf.mxu0
        %v1501 = vadd.f32 0.0, %v1500
        %v1502 = vpop.f32.mrf.mxu0
        %1503 = vmatprep.mubr.f32.mxu0 0.0
        %1504 = vmatmul.mubr.f32.gmra.mxu0 %v1330
        %v1505 = vpop.f32.mrf.mxu0
        %v1506 = vadd.f32 0.0, %v1505
        %v1507 = vpop.f32.mrf.mxu0
        %1508 = vmatprep.mubr.f32.mxu0 0.0
        %1509 = vmatmul.mubr.f32.gmra.mxu0 %v1333
        %v1510 = vpop.f32.mrf.mxu0
        %v1511 = vadd.f32 0.0, %v1510
        %v1512 = vpop.f32.mrf.mxu0
        %1513 = vmatprep.mubr.f32.mxu0 0.0
        %1514 = vmatmul.mubr.f32.gmra.mxu0 %v1336
        %v1515 = vpop.f32.mrf.mxu0
        %v1516 = vadd.f32 0.0, %v1515
        %v1517 = vpop.f32.mrf.mxu0
        %1518 = vmatprep.mubr.f32.mxu0 0.0
        %1519 = vmatmul.mubr.f32.gmra.mxu0 %v1339
        %v1520 = vpop.f32.mrf.mxu0
        %v1521 = vadd.f32 0.0, %v1520
        %v1522 = vpop.f32.mrf.mxu0
        %1523 = vmatprep.mubr.f32.mxu0 0.0
        %1524 = vmatmul.mubr.f32.gmra.mxu0 %v1342
        %v1525 = vpop.f32.mrf.mxu0
        %v1526 = vadd.f32 0.0, %v1525
        %v1527 = vpop.f32.mrf.mxu0
        %1528 = vmatprep.mubr.f32.mxu0 0.0
        %1529 = vmatmul.mubr.f32.gmra.mxu0 %v1345
        %v1530 = vpop.f32.mrf.mxu0
        %v1531 = vadd.f32 0.0, %v1530
        %v1532 = vpop.f32.mrf.mxu0
        %1533 = vmatprep.mubr.f32.mxu0 0.0
        %1534 = vmatmul.mubr.f32.gmra.mxu0 %v1348
        %v1535 = vpop.f32.mrf.mxu0
        %v1536 = vadd.f32 0.0, %v1535
        %v1537 = vpop.f32.mrf.mxu0
        %1538 = vmatprep.mubr.f32.mxu0 0.0
        %1539 = vmatmul.mubr.f32.gmra.mxu0 %v1351
        %v1540 = vpop.f32.mrf.mxu0
        %v1541 = vadd.f32 0.0, %v1540
        %v1542 = vpop.f32.mrf.mxu0
        %1543 = vmatprep.mubr.f32.mxu0 0.0
        %1544 = vmatmul.mubr.f32.gmra.mxu0 %v1354
        %v1545 = vpop.f32.mrf.mxu0
        %v1546 = vadd.f32 0.0, %v1545
        %v1547 = vpop.f32.mrf.mxu0
        %1548 = vmatprep.mubr.f32.mxu0 0.0
        %1549 = vmatmul.mubr.f32.gmra.mxu0 %v1357
        %v1550 = vpop.f32.mrf.mxu0
        %v1551 = vadd.f32 0.0, %v1550
        %v1552 = vpop.f32.mrf.mxu0
        %1553 = vmatprep.mubr.f32.mxu0 0.0
        %1554 = vmatmul.mubr.f32.gmra.mxu0 %v1360
        %v1555 = vpop.f32.mrf.mxu0
        %v1556 = vadd.f32 0.0, %v1555
        %v1557 = vpop.f32.mrf.mxu0
        %1558 = vmatprep.mubr.f32.mxu0 0.0
        %1559 = vmatmul.mubr.f32.gmra.mxu0 %v1363
        %v1560 = vpop.f32.mrf.mxu0
        %v1561 = vadd.f32 0.0, %v1560
        %v1562 = vpop.f32.mrf.mxu0
        %1563 = vmatprep.mubr.f32.mxu0 0.0
        %1564 = vmatmul.mubr.f32.gmra.mxu0 %v1366
        %v1565 = vpop.f32.mrf.mxu0
        %v1566 = vadd.f32 0.0, %v1565
        %v1567 = vpop.f32.mrf.mxu0
        %1568 = vmatprep.mubr.f32.mxu0 0.0
        %1569 = vmatmul.mubr.f32.gmra.mxu0 %v1369
        %v1570 = vpop.f32.mrf.mxu0
        %v1571 = vadd.f32 0.0, %v1570
        %v1572 = vpop.f32.mrf.mxu0
        %1573 = vmatprep.mubr.f32.mxu0 0.0
        %1574 = vmatmul.mubr.f32.gmra.mxu0 %v1372
        %v1575 = vpop.f32.mrf.mxu0
        %v1576 = vadd.f32 0.0, %v1575
        %v1577 = vpop.f32.mrf.mxu0
        %1578 = vmatprep.mubr.f32.mxu0 0.0
        %1579 = vmatmul.mubr.f32.gmra.mxu0 %v1375
        %v1580 = vpop.f32.mrf.mxu0
        %v1581 = vadd.f32 0.0, %v1580
        %v1582 = vpop.f32.mrf.mxu0
        %1583 = vmatprep.mubr.f32.mxu0 0.0
        %1584 = vmatmul.mubr.f32.gmra.mxu0 %v1378
        %v1585 = vpop.f32.mrf.mxu0
        %v1586 = vadd.f32 0.0, %v1585
        %v1587 = vpop.f32.mrf.mxu0
        %1588 = vmatprep.mubr.f32.mxu0 0.0
        %1589 = vmatmul.mubr.f32.gmra.mxu0 %v1381
        %v1590 = vpop.f32.mrf.mxu0
        %v1591 = vadd.f32 0.0, %v1590
        %v1592 = vpop.f32.mrf.mxu0
        %1593 = vmatprep.mubr.f32.mxu0 0.0
        %1594 = vmatmul.mubr.f32.gmra.mxu0 %v1384
        %v1595 = vpop.f32.mrf.mxu0
        %v1596 = vadd.f32 0.0, %v1595
        %v1597 = vpop.f32.mrf.mxu0
        %1598 = vmatprep.mubr.f32.mxu0 0.0
        %1599 = vmatmul.mubr.f32.gmra.mxu0 %v1387
        %v1600 = vpop.f32.mrf.mxu0
        %v1601 = vadd.f32 0.0, %v1600
        %v1602 = vpop.f32.mrf.mxu0
        %1603 = vmatprep.mubr.f32.mxu0 0.0
        %1604 = vmatmul.mubr.f32.gmra.mxu0 %v1390
        %v1605 = vpop.f32.mrf.mxu0
        %v1606 = vadd.f32 0.0, %v1605
        %v1607 = vpop.f32.mrf.mxu0
        %1608 = vmatprep.mubr.f32.mxu0 0.0
        %1609 = vmatmul.mubr.f32.gmra.mxu0 %v1393
        %v1610 = vpop.f32.mrf.mxu0
        %v1611 = vadd.f32 0.0, %v1610
        %v1612 = vpop.f32.mrf.mxu0
        %1613 = vmatprep.mubr.f32.mxu0 0.0
        %1614 = vmatmul.mubr.f32.gmra.mxu0 %v1396
        %v1615 = vpop.f32.mrf.mxu0
        %v1616 = vadd.f32 0.0, %v1615
        %v1617 = vpop.f32.mrf.mxu0
        %1618 = vmatprep.mubr.f32.mxu0 0.0
        %1619 = vmatmul.mubr.f32.gmra.mxu0 %v1399
        %v1620 = vpop.f32.mrf.mxu0
        %v1621 = vadd.f32 0.0, %v1620
        %v1622 = vpop.f32.mrf.mxu0
        %1623 = vmatprep.mubr.f32.mxu0 0.0
        %1624 = vmatmul.mubr.f32.gmra.mxu0 %v1402
        %v1625 = vpop.f32.mrf.mxu0
        %v1626 = vadd.f32 0.0, %v1625
        %v1627 = vpop.f32.mrf.mxu0
        %1628 = vdwg.mxu0
        %1630 = vset.pattern.permute.xlu0 1
        %1631 = vperm.xlu0 %1630, %v1137
        %v1632 = vpop.permute.xlu0 %1631
        %1635 = vset.pattern.permute.xlu0 1
        %1636 = vperm.xlu0 %1635, %v1142
        %v1637 = vpop.permute.xlu0 %1636
        %1640 = vset.pattern.permute.xlu0 1
        %1641 = vperm.xlu0 %1640, %v1147
        %v1642 = vpop.permute.xlu0 %1641
        %1645 = vset.pattern.permute.xlu0 1
        %1646 = vperm.xlu0 %1645, %v1152
        %v1647 = vpop.permute.xlu0 %1646
        %1650 = vset.pattern.permute.xlu0 1
        %1651 = vperm.xlu0 %1650, %v1157
        %v1652 = vpop.permute.xlu0 %1651
        %1655 = vset.pattern.permute.xlu0 1
        %1656 = vperm.xlu0 %1655, %v1162
        %v1657 = vpop.permute.xlu0 %1656
        %1660 = vset.pattern.permute.xlu0 1
        %1661 = vperm.xlu0 %1660, %v1167
        %v1662 = vpop.permute.xlu0 %1661
        %1665 = vset.pattern.permute.xlu0 1
        %1666 = vperm.xlu0 %1665, %v1172
        %v1667 = vpop.permute.xlu0 %1666
        %1670 = vset.pattern.permute.xlu0 1
        %1671 = vperm.xlu0 %1670, %v1177
        %v1672 = vpop.permute.xlu0 %1671
        %1675 = vset.pattern.permute.xlu0 1
        %1676 = vperm.xlu0 %1675, %v1182
        %v1677 = vpop.permute.xlu0 %1676
        %1680 = vset.pattern.permute.xlu0 1
        %1681 = vperm.xlu0 %1680, %v1187
        %v1682 = vpop.permute.xlu0 %1681
        %1685 = vset.pattern.permute.xlu0 1
        %1686 = vperm.xlu0 %1685, %v1192
        %v1687 = vpop.permute.xlu0 %1686
        %1690 = vset.pattern.permute.xlu0 1
        %1691 = vperm.xlu0 %1690, %v1197
        %v1692 = vpop.permute.xlu0 %1691
        %1695 = vset.pattern.permute.xlu0 1
        %1696 = vperm.xlu0 %1695, %v1202
        %v1697 = vpop.permute.xlu0 %1696
        %1700 = vset.pattern.permute.xlu0 1
        %1701 = vperm.xlu0 %1700, %v1207
        %v1702 = vpop.permute.xlu0 %1701
        %1705 = vset.pattern.permute.xlu0 1
        %1706 = vperm.xlu0 %1705, %v1212
        %v1707 = vpop.permute.xlu0 %1706
        %1710 = vset.pattern.permute.xlu0 1
        %1711 = vperm.xlu0 %1710, %v1217
        %v1712 = vpop.permute.xlu0 %1711
        %1715 = vset.pattern.permute.xlu0 1
        %1716 = vperm.xlu0 %1715, %v1222
        %v1717 = vpop.permute.xlu0 %1716
        %1720 = vset.pattern.permute.xlu0 1
        %1721 = vperm.xlu0 %1720, %v1227
        %v1722 = vpop.permute.xlu0 %1721
        %1725 = vset.pattern.permute.xlu0 1
        %1726 = vperm.xlu0 %1725, %v1232
        %v1727 = vpop.permute.xlu0 %1726
        %1730 = vset.pattern.permute.xlu0 1
        %1731 = vperm.xlu0 %1730, %v1237
        %v1732 = vpop.permute.xlu0 %1731
        %1735 = vset.pattern.permute.xlu0 1
        %1736 = vperm.xlu0 %1735, %v1242
        %v1737 = vpop.permute.xlu0 %1736
        %1740 = vset.pattern.permute.xlu0 1
        %1741 = vperm.xlu0 %1740, %v1247
        %v1742 = vpop.permute.xlu0 %1741
        %1745 = vset.pattern.permute.xlu0 1
        %1746 = vperm.xlu0 %1745, %v1252
        %v1747 = vpop.permute.xlu0 %1746
        %1750 = vset.pattern.permute.xlu0 1
        %1751 = vperm.xlu0 %1750, %v1257
        %v1752 = vpop.permute.xlu0 %1751
        %1755 = vset.pattern.permute.xlu0 1
        %1756 = vperm.xlu0 %1755, %v1262
        %v1757 = vpop.permute.xlu0 %1756
        %1760 = vset.pattern.permute.xlu0 1
        %1761 = vperm.xlu0 %1760, %v1267
        %v1762 = vpop.permute.xlu0 %1761
        %1765 = vset.pattern.permute.xlu0 1
        %1766 = vperm.xlu0 %1765, %v1272
        %v1767 = vpop.permute.xlu0 %1766
        %1770 = vset.pattern.permute.xlu0 1
        %1771 = vperm.xlu0 %1770, %v1277
        %v1772 = vpop.permute.xlu0 %1771
        %1775 = vset.pattern.permute.xlu0 1
        %1776 = vperm.xlu0 %1775, %v1282
        %v1777 = vpop.permute.xlu0 %1776
        %1780 = vset.pattern.permute.xlu0 1
        %1781 = vperm.xlu0 %1780, %v1287
        %v1782 = vpop.permute.xlu0 %1781
        %1785 = vset.pattern.permute.xlu0 1
        %1786 = vperm.xlu0 %1785, %v1292
        %v1787 = vpop.permute.xlu0 %1786
        %v1789 = vmul.f32 %v1632, %v1471
        %v1790 = vmul.f32 %v1637, %v1476
        %v1791 = vmul.f32 %v1642, %v1481
        %v1792 = vmul.f32 %v1647, %v1486
        %v1793 = vmul.f32 %v1652, %v1491
        %v1794 = vmul.f32 %v1657, %v1496
        %v1795 = vmul.f32 %v1662, %v1501
        %v1796 = vmul.f32 %v1667, %v1506
        %v1797 = vmul.f32 %v1672, %v1511
        %v1798 = vmul.f32 %v1677, %v1516
        %v1799 = vmul.f32 %v1682, %v1521
        %v1800 = vmul.f32 %v1687, %v1526
        %v1801 = vmul.f32 %v1692, %v1531
        %v1802 = vmul.f32 %v1697, %v1536
        %v1803 = vmul.f32 %v1702, %v1541
        %v1804 = vmul.f32 %v1707, %v1546
        %v1805 = vmul.f32 %v1712, %v1551
        %v1806 = vmul.f32 %v1717, %v1556
        %v1807 = vmul.f32 %v1722, %v1561
        %v1808 = vmul.f32 %v1727, %v1566
        %v1809 = vmul.f32 %v1732, %v1571
        %v1810 = vmul.f32 %v1737, %v1576
        %v1811 = vmul.f32 %v1742, %v1581
        %v1812 = vmul.f32 %v1747, %v1586
        %v1813 = vmul.f32 %v1752, %v1591
        %v1814 = vmul.f32 %v1757, %v1596
        %v1815 = vmul.f32 %v1762, %v1601
        %v1816 = vmul.f32 %v1767, %v1606
        %v1817 = vmul.f32 %v1772, %v1611
        %v1818 = vmul.f32 %v1777, %v1616
        %v1819 = vmul.f32 %v1782, %v1621
        %v1820 = vmul.f32 %v1787, %v1626
        %1853 = vrot.lane.b32.xlu0 %v1789, 1
        %v1854 = vpop.permute.xlu0 %1853
        %1855 = vrot.lane.b32.xlu0 %v1790, 1
        %v1856 = vpop.permute.xlu0 %1855
        %1857 = vrot.lane.b32.xlu0 %v1791, 1
        %v1858 = vpop.permute.xlu0 %1857
        %1859 = vrot.lane.b32.xlu0 %v1792, 1
        %v1860 = vpop.permute.xlu0 %1859
        %1861 = vrot.lane.b32.xlu0 %v1793, 1
        %v1862 = vpop.permute.xlu0 %1861
        %1863 = vrot.lane.b32.xlu0 %v1794, 1
        %v1864 = vpop.permute.xlu0 %1863
        %1865 = vrot.lane.b32.xlu0 %v1795, 1
        %v1866 = vpop.permute.xlu0 %1865
        %1867 = vrot.lane.b32.xlu0 %v1796, 1
        %v1868 = vpop.permute.xlu0 %1867
        %1869 = vrot.lane.b32.xlu0 %v1797, 1
        %v1870 = vpop.permute.xlu0 %1869
        %1871 = vrot.lane.b32.xlu0 %v1798, 1
        %v1872 = vpop.permute.xlu0 %1871
        %1873 = vrot.lane.b32.xlu0 %v1799, 1
        %v1874 = vpop.permute.xlu0 %1873
        %1875 = vrot.lane.b32.xlu0 %v1800, 1
        %v1876 = vpop.permute.xlu0 %1875
        %1877 = vrot.lane.b32.xlu0 %v1801, 1
        %v1878 = vpop.permute.xlu0 %1877
        %1879 = vrot.lane.b32.xlu0 %v1802, 1
        %v1880 = vpop.permute.xlu0 %1879
        %1881 = vrot.lane.b32.xlu0 %v1803, 1
        %v1882 = vpop.permute.xlu0 %1881
        %1883 = vrot.lane.b32.xlu0 %v1804, 1
        %v1884 = vpop.permute.xlu0 %1883
        %1885 = vrot.lane.b32.xlu0 %v1805, 1
        %v1886 = vpop.permute.xlu0 %1885
        %1887 = vrot.lane.b32.xlu0 %v1806, 1
        %v1888 = vpop.permute.xlu0 %1887
        %1889 = vrot.lane.b32.xlu0 %v1807, 1
        %v1890 = vpop.permute.xlu0 %1889
        %1891 = vrot.lane.b32.xlu0 %v1808, 1
        %v1892 = vpop.permute.xlu0 %1891
        %1893 = vrot.lane.b32.xlu0 %v1809, 1
        %v1894 = vpop.permute.xlu0 %1893
        %1895 = vrot.lane.b32.xlu0 %v1810, 1
        %v1896 = vpop.permute.xlu0 %1895
        %1897 = vrot.lane.b32.xlu0 %v1811, 1
        %v1898 = vpop.permute.xlu0 %1897
        %1899 = vrot.lane.b32.xlu0 %v1812, 1
        %v1900 = vpop.permute.xlu0 %1899
        %1901 = vrot.lane.b32.xlu0 %v1813, 1
        %v1902 = vpop.permute.xlu0 %1901
        %1903 = vrot.lane.b32.xlu0 %v1814, 1
        %v1904 = vpop.permute.xlu0 %1903
        %1905 = vrot.lane.b32.xlu0 %v1815, 1
        %v1906 = vpop.permute.xlu0 %1905
        %1907 = vrot.lane.b32.xlu0 %v1816, 1
        %v1908 = vpop.permute.xlu0 %1907
        %1909 = vrot.lane.b32.xlu0 %v1817, 1
        %v1910 = vpop.permute.xlu0 %1909
        %1911 = vrot.lane.b32.xlu0 %v1818, 1
        %v1912 = vpop.permute.xlu0 %1911
        %1913 = vrot.lane.b32.xlu0 %v1819, 1
        %v1914 = vpop.permute.xlu0 %1913
        %1915 = vrot.lane.b32.xlu0 %v1820, 1
        %v1916 = vpop.permute.xlu0 %1915
        %vm1949 = vcmask 7168
        %v1950 = vsel %vm1949, %v1137, %v1854
        %v1951 = vsel %vm1949, %v1142, %v1856
        %v1952 = vsel %vm1949, %v1147, %v1858
        %v1953 = vsel %vm1949, %v1152, %v1860
        %v1954 = vsel %vm1949, %v1157, %v1862
        %v1955 = vsel %vm1949, %v1162, %v1864
        %v1956 = vsel %vm1949, %v1167, %v1866
        %v1957 = vsel %vm1949, %v1172, %v1868
        %v1958 = vsel %vm1949, %v1177, %v1870
        %v1959 = vsel %vm1949, %v1182, %v1872
        %v1960 = vsel %vm1949, %v1187, %v1874
        %v1961 = vsel %vm1949, %v1192, %v1876
        %v1962 = vsel %vm1949, %v1197, %v1878
        %v1963 = vsel %vm1949, %v1202, %v1880
        %v1964 = vsel %vm1949, %v1207, %v1882
        %v1965 = vsel %vm1949, %v1212, %v1884
        %v1966 = vsel %vm1949, %v1217, %v1886
        %v1967 = vsel %vm1949, %v1222, %v1888
        %v1968 = vsel %vm1949, %v1227, %v1890
        %v1969 = vsel %vm1949, %v1232, %v1892
        %v1970 = vsel %vm1949, %v1237, %v1894
        %v1971 = vsel %vm1949, %v1242, %v1896
        %v1972 = vsel %vm1949, %v1247, %v1898
        %v1973 = vsel %vm1949, %v1252, %v1900
        %v1974 = vsel %vm1949, %v1257, %v1902
        %v1975 = vsel %vm1949, %v1262, %v1904
        %v1976 = vsel %vm1949, %v1267, %v1906
        %v1977 = vsel %vm1949, %v1272, %v1908
        %v1978 = vsel %vm1949, %v1277, %v1910
        %v1979 = vsel %vm1949, %v1282, %v1912
        %v1980 = vsel %vm1949, %v1287, %v1914
        %v1981 = vsel %vm1949, %v1292, %v1916
        %vm1982 = vcmask 31744
        %1983 = vst.msk [vmem:[%s308] sm:$0xff] %vm1982, %v1950
        %1984 = vst.msk [vmem:[%s308 + $0x8] sm:$0xff] %vm1982, %v1951
        %1985 = vst.msk [vmem:[%s308 + $0x10] sm:$0xff] %vm1982, %v1952
        %1986 = vst.msk [vmem:[%s308 + $0x18] sm:$0xff] %vm1982, %v1953
        %1987 = vst.msk [vmem:[%s308 + $0x20] sm:$0xff] %vm1982, %v1954
        %1988 = vst.msk [vmem:[%s308 + $0x28] sm:$0xff] %vm1982, %v1955
        %1989 = vst.msk [vmem:[%s308 + $0x30] sm:$0xff] %vm1982, %v1956
        %1990 = vst.msk [vmem:[%s308 + $0x38] sm:$0xff] %vm1982, %v1957
        %1991 = vst.msk [vmem:[%s308 + $0x40] sm:$0xff] %vm1982, %v1958
        %1992 = vst.msk [vmem:[%s308 + $0x48] sm:$0xff] %vm1982, %v1959
        %1993 = vst.msk [vmem:[%s308 + $0x50] sm:$0xff] %vm1982, %v1960
        %1994 = vst.msk [vmem:[%s308 + $0x58] sm:$0xff] %vm1982, %v1961
        %1995 = vst.msk [vmem:[%s308 + $0x60] sm:$0xff] %vm1982, %v1962
        %1996 = vst.msk [vmem:[%s308 + $0x68] sm:$0xff] %vm1982, %v1963
        %1997 = vst.msk [vmem:[%s308 + $0x70] sm:$0xff] %vm1982, %v1964
        %1998 = vst.msk [vmem:[%s308 + $0x78] sm:$0xff] %vm1982, %v1965
        %1999 = vst.msk [vmem:[%s308 + $0x80] sm:$0xff] %vm1982, %v1966
        %2000 = vst.msk [vmem:[%s308 + $0x88] sm:$0xff] %vm1982, %v1967
        %2001 = vst.msk [vmem:[%s308 + $0x90] sm:$0xff] %vm1982, %v1968
        %2002 = vst.msk [vmem:[%s308 + $0x98] sm:$0xff] %vm1982, %v1969
        %2003 = vst.msk [vmem:[%s308 + $0xa0] sm:$0xff] %vm1982, %v1970
        %2004 = vst.msk [vmem:[%s308 + $0xa8] sm:$0xff] %vm1982, %v1971
        %2005 = vst.msk [vmem:[%s308 + $0xb0] sm:$0xff] %vm1982, %v1972
        %2006 = vst.msk [vmem:[%s308 + $0xb8] sm:$0xff] %vm1982, %v1973
        %2007 = vst.msk [vmem:[%s308 + $0xc0] sm:$0xff] %vm1982, %v1974
        %2008 = vst.msk [vmem:[%s308 + $0xc8] sm:$0xff] %vm1982, %v1975
        %2009 = vst.msk [vmem:[%s308 + $0xd0] sm:$0xff] %vm1982, %v1976
        %2010 = vst.msk [vmem:[%s308 + $0xd8] sm:$0xff] %vm1982, %v1977
        %2011 = vst.msk [vmem:[%s308 + $0xe0] sm:$0xff] %vm1982, %v1978
        %2012 = vst.msk [vmem:[%s308 + $0xe8] sm:$0xff] %vm1982, %v1979
        %2013 = vst.msk [vmem:[%s308 + $0xf0] sm:$0xff] %vm1982, %v1980
        %2014 = vst.msk [vmem:[%s308 + $0xf8] sm:$0xff] %vm1982, %v1981
        %s2015 = sand.u32 %s183, 1
        %s2016 = sand.u32 %s183, 1
        %s2017 = smul.addr %s2016, 256
        %s2018 = scalar_lea.vmem [#allocation2], %s2017
        // Predicated region
        $region49: #{multipole_forward.1} parent=47 // pred_check
          %p2019 = pneg %p193
        $region50: #{multipole_forward.1} parent=47 // pred_check_branch
          %2021 = sbr.rel (%p2019) target = $region52
        $region51: #{multipole_forward.1} parent=47 // pred_region
          %s2022 = smul.u32 32, %s18
          %s2023 = ssub.s32 63, %s2022
          %p2024 = scmp.lt.s32.totalorder %s2023, 32
          %s2025 = scalar_select %p2024, %s2023, 32
          %s2026 = smul.u32 128, %s2025
          %p2027 = scmp.ne.s32.totalorder 0, %s2026
          %s2028 = smul.addr %s2022, 8
          %s2029 = scalar_lea.vmem %s7, %s2028
          // Predicated region
          $region53: #{multipole_forward.1} parent=51 // pred_check
            %p2030 = pneg %p2027
          $region54: #{multipole_forward.1} parent=51 // pred_check_branch
            %2032 = sbr.rel (%p2030) target = $region56
          $region55: #{multipole_forward.1} parent=51 // pred_region
            // Predicated region
            $region57: #{multipole_forward.1} parent=55 // pred_check
              _
            $region58: #{multipole_forward.1} parent=55 // pred_check_branch
              %2034 = sbr.rel (0) target = $region60
            $region59: #{multipole_forward.1} parent=55 // pred_region
              // Predicated region
              $region79: #{multipole_forward.1} parent=59 // pred_check
                _
              $region80: #{multipole_forward.1} parent=59 // pred_check_branch
                %2146 = sbr.rel (0) target = $region82
              $region81: #{multipole_forward.1} parent=59 // pred_region
                %s2147 = sshrl.u32 %s2025, 5
                // While loop
                $region83: #{multipole_forward.1} parent=81 // loop_pre_header
                  _
                $region84: #{multipole_forward.1} parent=81 // loop_header
                  %s2149 = sphi 0, %s2151
                  %p2150 = scmp.ge.s32.totalorder %s2149, %s2147
                  %s2154 = sphi 0, %s2223
                  %s2155 = sphi %s2018, %s2226
                  %s2156 = sphi %s2029, %s2227
                $region85: #{multipole_forward.1} parent=81 // loop_header_branch
                  %2153 = sbr.rel (%p2150) target = $region89
                $region86: #{multipole_forward.1} parent=81 // loop_body
                  %v2157 = vld [vmem:[%s2155] sm:$0xff]
                  %2158 = vst [vmem:[%s2156] sm:$0xff] %v2157
                  %v2159 = vld [vmem:[%s2155 + $0x8] sm:$0xff]
                  %2160 = vst [vmem:[%s2156 + $0x8] sm:$0xff] %v2159
                  %v2161 = vld [vmem:[%s2155 + $0x10] sm:$0xff]
                  %2162 = vst [vmem:[%s2156 + $0x10] sm:$0xff] %v2161
                  %v2163 = vld [vmem:[%s2155 + $0x18] sm:$0xff]
                  %2164 = vst [vmem:[%s2156 + $0x18] sm:$0xff] %v2163
                  %v2165 = vld [vmem:[%s2155 + $0x20] sm:$0xff]
                  %2166 = vst [vmem:[%s2156 + $0x20] sm:$0xff] %v2165
                  %v2167 = vld [vmem:[%s2155 + $0x28] sm:$0xff]
                  %2168 = vst [vmem:[%s2156 + $0x28] sm:$0xff] %v2167
                  %v2169 = vld [vmem:[%s2155 + $0x30] sm:$0xff]
                  %2170 = vst [vmem:[%s2156 + $0x30] sm:$0xff] %v2169
                  %v2171 = vld [vmem:[%s2155 + $0x38] sm:$0xff]
                  %2172 = vst [vmem:[%s2156 + $0x38] sm:$0xff] %v2171
                  %v2173 = vld [vmem:[%s2155 + $0x40] sm:$0xff]
                  %2174 = vst [vmem:[%s2156 + $0x40] sm:$0xff] %v2173
                  %v2175 = vld [vmem:[%s2155 + $0x48] sm:$0xff]
                  %2176 = vst [vmem:[%s2156 + $0x48] sm:$0xff] %v2175
                  %v2177 = vld [vmem:[%s2155 + $0x50] sm:$0xff]
                  %2178 = vst [vmem:[%s2156 + $0x50] sm:$0xff] %v2177
                  %v2179 = vld [vmem:[%s2155 + $0x58] sm:$0xff]
                  %2180 = vst [vmem:[%s2156 + $0x58] sm:$0xff] %v2179
                  %v2181 = vld [vmem:[%s2155 + $0x60] sm:$0xff]
                  %2182 = vst [vmem:[%s2156 + $0x60] sm:$0xff] %v2181
                  %v2183 = vld [vmem:[%s2155 + $0x68] sm:$0xff]
                  %2184 = vst [vmem:[%s2156 + $0x68] sm:$0xff] %v2183
                  %v2185 = vld [vmem:[%s2155 + $0x70] sm:$0xff]
                  %2186 = vst [vmem:[%s2156 + $0x70] sm:$0xff] %v2185
                  %v2187 = vld [vmem:[%s2155 + $0x78] sm:$0xff]
                  %2188 = vst [vmem:[%s2156 + $0x78] sm:$0xff] %v2187
                  %v2189 = vld [vmem:[%s2155 + $0x80] sm:$0xff]
                  %2190 = vst [vmem:[%s2156 + $0x80] sm:$0xff] %v2189
                  %v2191 = vld [vmem:[%s2155 + $0x88] sm:$0xff]
                  %2192 = vst [vmem:[%s2156 + $0x88] sm:$0xff] %v2191
                  %v2193 = vld [vmem:[%s2155 + $0x90] sm:$0xff]
                  %2194 = vst [vmem:[%s2156 + $0x90] sm:$0xff] %v2193
                  %v2195 = vld [vmem:[%s2155 + $0x98] sm:$0xff]
                  %2196 = vst [vmem:[%s2156 + $0x98] sm:$0xff] %v2195
                  %v2197 = vld [vmem:[%s2155 + $0xa0] sm:$0xff]
                  %2198 = vst [vmem:[%s2156 + $0xa0] sm:$0xff] %v2197
                  %v2199 = vld [vmem:[%s2155 + $0xa8] sm:$0xff]
                  %2200 = vst [vmem:[%s2156 + $0xa8] sm:$0xff] %v2199
                  %v2201 = vld [vmem:[%s2155 + $0xb0] sm:$0xff]
                  %2202 = vst [vmem:[%s2156 + $0xb0] sm:$0xff] %v2201
                  %v2203 = vld [vmem:[%s2155 + $0xb8] sm:$0xff]
                  %2204 = vst [vmem:[%s2156 + $0xb8] sm:$0xff] %v2203
                  %v2205 = vld [vmem:[%s2155 + $0xc0] sm:$0xff]
                  %2206 = vst [vmem:[%s2156 + $0xc0] sm:$0xff] %v2205
                  %v2207 = vld [vmem:[%s2155 + $0xc8] sm:$0xff]
                  %2208 = vst [vmem:[%s2156 + $0xc8] sm:$0xff] %v2207
                  %v2209 = vld [vmem:[%s2155 + $0xd0] sm:$0xff]
                  %2210 = vst [vmem:[%s2156 + $0xd0] sm:$0xff] %v2209
                  %v2211 = vld [vmem:[%s2155 + $0xd8] sm:$0xff]
                  %2212 = vst [vmem:[%s2156 + $0xd8] sm:$0xff] %v2211
                  %v2213 = vld [vmem:[%s2155 + $0xe0] sm:$0xff]
                  %2214 = vst [vmem:[%s2156 + $0xe0] sm:$0xff] %v2213
                  %v2215 = vld [vmem:[%s2155 + $0xe8] sm:$0xff]
                  %2216 = vst [vmem:[%s2156 + $0xe8] sm:$0xff] %v2215
                  %v2217 = vld [vmem:[%s2155 + $0xf0] sm:$0xff]
                  %2218 = vst [vmem:[%s2156 + $0xf0] sm:$0xff] %v2217
                  %v2219 = vld [vmem:[%s2155 + $0xf8] sm:$0xff]
                  %2220 = vst [vmem:[%s2156 + $0xf8] sm:$0xff] %v2219
                  %s2221 = sadd.s32 1, %s2154
                  %p2222 = scmp.ge.s32.totalorder %s2221, %s2147
                  %s2223 = scalar_select %p2222, 0, %s2221
                  %s2224 = smul.u32 %s2223, 256
                  %s2225 = smul.u32 %s2223, 256
                  %s2226 = scalar_lea.vmem %s2018, %s2224 [#allocation2]
                  %s2227 = scalar_lea.vmem %s2029, %s2225
                $region87: #{multipole_forward.1} parent=81 // loop_footer
                  %s2151 = sadd.s32 %s2149, 1
                $region88: #{multipole_forward.1} parent=81 // loop_footer_branch
                  %2148 = sbr.rel target = $region84
                $region89: #{multipole_forward.1} parent=81 // loop_exit
                  _
                %s2228 = sshrl.u32 %s2025, 5
                %s2229 = sand.u32 %s2025, 31
                %s2230 = smul.u32 %s2228, 32
                %s2231 = smul.u32 8, %s2230
                %s2232 = scalar_lea.vmem %s2018, %s2231 [#allocation2]
                %s2233 = smul.u32 8, %s2230
                %s2234 = scalar_lea.vmem %s2029, %s2233
                // While loop
                $region90: #{multipole_forward.1} parent=81 // loop_pre_header
                  _
                $region91: #{multipole_forward.1} parent=81 // loop_header
                  %s2236 = sphi 0, %s2238
                  %p2237 = scmp.ge.s32.totalorder %s2236, %s2229
                  %s2241 = sphi 0, %s2248
                  %s2242 = sphi %s2232, %s2251
                  %s2243 = sphi %s2234, %s2252
                $region92: #{multipole_forward.1} parent=81 // loop_header_branch
                  %2240 = sbr.rel (%p2237) target = $region96
                $region93: #{multipole_forward.1} parent=81 // loop_body
                  %v2244 = vld [vmem:[%s2242] sm:$0xff]
                  %2245 = vst [vmem:[%s2243] sm:$0xff] %v2244
                  %s2246 = sadd.s32 1, %s2241
                  %p2247 = scmp.ge.s32.totalorder %s2246, %s2229
                  %s2248 = scalar_select %p2247, 0, %s2246
                  %s2249 = smul.u32 %s2248, 8
                  %s2250 = smul.u32 %s2248, 8
                  %s2251 = scalar_lea.vmem %s2232, %s2249 [#allocation2]
                  %s2252 = scalar_lea.vmem %s2234, %s2250
                $region94: #{multipole_forward.1} parent=81 // loop_footer
                  %s2238 = sadd.s32 %s2236, 1
                $region95: #{multipole_forward.1} parent=81 // loop_footer_branch
                  %2235 = sbr.rel target = $region91
                $region96: #{multipole_forward.1} parent=81 // loop_exit
                  _
              $region82: #{multipole_forward.1} parent=59 // pred_fallthru
                _
              // Predicated region
              $region97: #{multipole_forward.1} parent=59 // pred_check
                _
              $region98: #{multipole_forward.1} parent=59 // pred_check_branch
                %2254 = sbr.rel target = $region100
              $region99: #{multipole_forward.1} parent=59 // pred_region
                _
              $region100: #{multipole_forward.1} parent=59 // pred_fallthru
                _
            $region60: #{multipole_forward.1} parent=55 // pred_fallthru
              _
            // Predicated region
            $region61: #{multipole_forward.1} parent=55 // pred_check
              _
            $region62: #{multipole_forward.1} parent=55 // pred_check_branch
              %2036 = sbr.rel target = $region64
            $region63: #{multipole_forward.1} parent=55 // pred_region
              %s2038 = ssub.s32 256, 1
              %s2039 = sshrl.u32 %s2025, 5
              // While loop
              $region65: #{multipole_forward.1} parent=63 // loop_pre_header
                _
              $region66: #{multipole_forward.1} parent=63 // loop_header
                %s2041 = sphi 0, %s2043
                %p2042 = scmp.ge.s32.totalorder %s2041, %s2039
                %s2046 = sphi 0, %s2115
                %s2047 = sphi %s2018, %s2118
                %s2048 = sphi %s2029, %s2119
              $region67: #{multipole_forward.1} parent=63 // loop_header_branch
                %2045 = sbr.rel (%p2042) target = $region71
              $region68: #{multipole_forward.1} parent=63 // loop_body
                %v2049 = vld [vmem:[%s2047] sm:%s2038]
                %2050 = vst [vmem:[%s2048] sm:%s2038] %v2049
                %v2051 = vld [vmem:[%s2047 + $0x8] sm:%s2038]
                %2052 = vst [vmem:[%s2048 + $0x8] sm:%s2038] %v2051
                %v2053 = vld [vmem:[%s2047 + $0x10] sm:%s2038]
                %2054 = vst [vmem:[%s2048 + $0x10] sm:%s2038] %v2053
                %v2055 = vld [vmem:[%s2047 + $0x18] sm:%s2038]
                %2056 = vst [vmem:[%s2048 + $0x18] sm:%s2038] %v2055
                %v2057 = vld [vmem:[%s2047 + $0x20] sm:%s2038]
                %2058 = vst [vmem:[%s2048 + $0x20] sm:%s2038] %v2057
                %v2059 = vld [vmem:[%s2047 + $0x28] sm:%s2038]
                %2060 = vst [vmem:[%s2048 + $0x28] sm:%s2038] %v2059
                %v2061 = vld [vmem:[%s2047 + $0x30] sm:%s2038]
                %2062 = vst [vmem:[%s2048 + $0x30] sm:%s2038] %v2061
                %v2063 = vld [vmem:[%s2047 + $0x38] sm:%s2038]
                %2064 = vst [vmem:[%s2048 + $0x38] sm:%s2038] %v2063
                %v2065 = vld [vmem:[%s2047 + $0x40] sm:%s2038]
                %2066 = vst [vmem:[%s2048 + $0x40] sm:%s2038] %v2065
                %v2067 = vld [vmem:[%s2047 + $0x48] sm:%s2038]
                %2068 = vst [vmem:[%s2048 + $0x48] sm:%s2038] %v2067
                %v2069 = vld [vmem:[%s2047 + $0x50] sm:%s2038]
                %2070 = vst [vmem:[%s2048 + $0x50] sm:%s2038] %v2069
                %v2071 = vld [vmem:[%s2047 + $0x58] sm:%s2038]
                %2072 = vst [vmem:[%s2048 + $0x58] sm:%s2038] %v2071
                %v2073 = vld [vmem:[%s2047 + $0x60] sm:%s2038]
                %2074 = vst [vmem:[%s2048 + $0x60] sm:%s2038] %v2073
                %v2075 = vld [vmem:[%s2047 + $0x68] sm:%s2038]
                %2076 = vst [vmem:[%s2048 + $0x68] sm:%s2038] %v2075
                %v2077 = vld [vmem:[%s2047 + $0x70] sm:%s2038]
                %2078 = vst [vmem:[%s2048 + $0x70] sm:%s2038] %v2077
                %v2079 = vld [vmem:[%s2047 + $0x78] sm:%s2038]
                %2080 = vst [vmem:[%s2048 + $0x78] sm:%s2038] %v2079
                %v2081 = vld [vmem:[%s2047 + $0x80] sm:%s2038]
                %2082 = vst [vmem:[%s2048 + $0x80] sm:%s2038] %v2081
                %v2083 = vld [vmem:[%s2047 + $0x88] sm:%s2038]
                %2084 = vst [vmem:[%s2048 + $0x88] sm:%s2038] %v2083
                %v2085 = vld [vmem:[%s2047 + $0x90] sm:%s2038]
                %2086 = vst [vmem:[%s2048 + $0x90] sm:%s2038] %v2085
                %v2087 = vld [vmem:[%s2047 + $0x98] sm:%s2038]
                %2088 = vst [vmem:[%s2048 + $0x98] sm:%s2038] %v2087
                %v2089 = vld [vmem:[%s2047 + $0xa0] sm:%s2038]
                %2090 = vst [vmem:[%s2048 + $0xa0] sm:%s2038] %v2089
                %v2091 = vld [vmem:[%s2047 + $0xa8] sm:%s2038]
                %2092 = vst [vmem:[%s2048 + $0xa8] sm:%s2038] %v2091
                %v2093 = vld [vmem:[%s2047 + $0xb0] sm:%s2038]
                %2094 = vst [vmem:[%s2048 + $0xb0] sm:%s2038] %v2093
                %v2095 = vld [vmem:[%s2047 + $0xb8] sm:%s2038]
                %2096 = vst [vmem:[%s2048 + $0xb8] sm:%s2038] %v2095
                %v2097 = vld [vmem:[%s2047 + $0xc0] sm:%s2038]
                %2098 = vst [vmem:[%s2048 + $0xc0] sm:%s2038] %v2097
                %v2099 = vld [vmem:[%s2047 + $0xc8] sm:%s2038]
                %2100 = vst [vmem:[%s2048 + $0xc8] sm:%s2038] %v2099
                %v2101 = vld [vmem:[%s2047 + $0xd0] sm:%s2038]
                %2102 = vst [vmem:[%s2048 + $0xd0] sm:%s2038] %v2101
                %v2103 = vld [vmem:[%s2047 + $0xd8] sm:%s2038]
                %2104 = vst [vmem:[%s2048 + $0xd8] sm:%s2038] %v2103
                %v2105 = vld [vmem:[%s2047 + $0xe0] sm:%s2038]
                %2106 = vst [vmem:[%s2048 + $0xe0] sm:%s2038] %v2105
                %v2107 = vld [vmem:[%s2047 + $0xe8] sm:%s2038]
                %2108 = vst [vmem:[%s2048 + $0xe8] sm:%s2038] %v2107
                %v2109 = vld [vmem:[%s2047 + $0xf0] sm:%s2038]
                %2110 = vst [vmem:[%s2048 + $0xf0] sm:%s2038] %v2109
                %v2111 = vld [vmem:[%s2047 + $0xf8] sm:%s2038]
                %2112 = vst [vmem:[%s2048 + $0xf8] sm:%s2038] %v2111
                %s2113 = sadd.s32 1, %s2046
                %p2114 = scmp.ge.s32.totalorder %s2113, %s2039
                %s2115 = scalar_select %p2114, 0, %s2113
                %s2116 = smul.u32 %s2115, 256
                %s2117 = smul.u32 %s2115, 256
                %s2118 = scalar_lea.vmem %s2018, %s2116 [#allocation2]
                %s2119 = scalar_lea.vmem %s2029, %s2117
              $region69: #{multipole_forward.1} parent=63 // loop_footer
                %s2043 = sadd.s32 %s2041, 1
              $region70: #{multipole_forward.1} parent=63 // loop_footer_branch
                %2040 = sbr.rel target = $region66
              $region71: #{multipole_forward.1} parent=63 // loop_exit
                _
              %s2120 = sshrl.u32 %s2025, 5
              %s2121 = sand.u32 %s2025, 31
              %s2122 = smul.u32 %s2120, 32
              %s2123 = smul.u32 8, %s2122
              %s2124 = scalar_lea.vmem %s2018, %s2123 [#allocation2]
              %s2125 = smul.u32 8, %s2122
              %s2126 = scalar_lea.vmem %s2029, %s2125
              // While loop
              $region72: #{multipole_forward.1} parent=63 // loop_pre_header
                _
              $region73: #{multipole_forward.1} parent=63 // loop_header
                %s2128 = sphi 0, %s2130
                %p2129 = scmp.ge.s32.totalorder %s2128, %s2121
                %s2133 = sphi 0, %s2140
                %s2134 = sphi %s2124, %s2143
                %s2135 = sphi %s2126, %s2144
              $region74: #{multipole_forward.1} parent=63 // loop_header_branch
                %2132 = sbr.rel (%p2129) target = $region78
              $region75: #{multipole_forward.1} parent=63 // loop_body
                %v2136 = vld [vmem:[%s2134] sm:%s2038]
                %2137 = vst [vmem:[%s2135] sm:%s2038] %v2136
                %s2138 = sadd.s32 1, %s2133
                %p2139 = scmp.ge.s32.totalorder %s2138, %s2121
                %s2140 = scalar_select %p2139, 0, %s2138
                %s2141 = smul.u32 %s2140, 8
                %s2142 = smul.u32 %s2140, 8
                %s2143 = scalar_lea.vmem %s2124, %s2141 [#allocation2]
                %s2144 = scalar_lea.vmem %s2126, %s2142
              $region76: #{multipole_forward.1} parent=63 // loop_footer
                %s2130 = sadd.s32 %s2128, 1
              $region77: #{multipole_forward.1} parent=63 // loop_footer_branch
                %2127 = sbr.rel target = $region73
              $region78: #{multipole_forward.1} parent=63 // loop_exit
                _
            $region64: #{multipole_forward.1} parent=55 // pred_fallthru
              _
          $region56: #{multipole_forward.1} parent=51 // pred_fallthru
            _
          %2255 = vnop
        $region52: #{multipole_forward.1} parent=47 // pred_fallthru
          _
      $region48: #{multipole_forward.1} parent=5 // pred_fallthru
        _
      %p2256 = scmp.le.s32.totalorder 2, %s13
      // Predicated region
      $region101: #{multipole_forward.1} parent=5 // pred_check
        %p2257 = pneg %p2256
      $region102: #{multipole_forward.1} parent=5 // pred_check_branch
        %2259 = sbr.rel (%p2257) target = $region104
      $region103: #{multipole_forward.1} parent=5 // pred_region
        %s2260 = ssub.s32 %s13, 2
        // Predicated region
        $region105: #{multipole_forward.1} parent=103 // pred_check
          %p2261 = pneg %p199
        $region106: #{multipole_forward.1} parent=103 // pred_check_branch
          %2263 = sbr.rel (%p2261) target = $region108
        $region107: #{multipole_forward.1} parent=103 // pred_region
          %s2264 = sand.u32 %s184, 1
          %s2265 = sand.u32 %s184, 1
          %s2266 = smul.addr %s2265, 256
          %s2267 = scalar_lea.vmem [#allocation2], %s2266
        $region108: #{multipole_forward.1} parent=103 // pred_fallthru
          _
      $region104: #{multipole_forward.1} parent=5 // pred_fallthru
        _
    $region6: #{multipole_forward.1} parent=1 // loop_footer
      %s17 = sadd.s32 1, %s13
    $region7: #{multipole_forward.1} parent=1 // loop_footer_branch
      %12 = sbr.rel target = $region3
    $region8: #{multipole_forward.1} parent=1 // loop_exit
      _

</llo_original>
